<compile_context>
chip_gen: v7x
topology: tpu7x:2x2x1
jax: 0.10.0
libtpu: 0.0.40
codegen_flags: <defaults>
</compile_context>

<pallas_src>
import math
import functools

import jax
import jax.numpy as jnp
from jax import lax
from jax.experimental import pallas as pl
from jax.experimental.pallas import tpu as pltpu

LN_EPS = 1e-6


# ----------------------------- in-kernel helpers -----------------------------

def _ln_rows(x, g, b):
    """Row-wise LayerNorm matching the reference: unbiased std (ddof=1), eps added to std."""
    d = x.shape[-1]
    mean = jnp.mean(x, axis=-1, keepdims=True)
    var = jnp.sum((x - mean) ** 2, axis=-1, keepdims=True) * (1.0 / (d - 1))
    inv = 1.0 / (jnp.sqrt(var) + LN_EPS)          # exact reciprocal (EUP) for LN accuracy
    return g * (x - mean) * inv + b


# ----------------------------- fused encoder-stack kernel -----------------------------

def _encoder_stack_kernel(x_ref, mask_ref,
                          ln1_g_ref, ln1_b_ref,
                          wqkv_ref, bqkv_ref,
                          wo_ref, bo_ref,
                          ln2_g_ref, ln2_b_ref,
                          w1_ref, b1_ref, w2_ref, b2_ref,
                          fin_g_ref, fin_b_ref,
                          o_ref, res_ref, *, heads):
    l = pl.program_id(1)

    # Layer 0: load the embedded tokens into the VMEM-resident residual stream.
    @pl.when(l == 0)
    def _():
        res_ref[...] = x_ref[0]

    x = res_ref[...]                               # (S, D) f32 residual stream (one batch row)
    S, D = x.shape
    dh = D // heads
    key_valid = mask_ref[0] != 0                   # (1, S) int key-padding mask -> bool

    # ---- LN1 -> fused QKV projection: one (S,D)@(D,3D) MXU matmul ----
    y = _ln_rows(x, ln1_g_ref[0], ln1_b_ref[0]).astype(jnp.bfloat16)
    qkv = jnp.dot(y, wqkv_ref[0], preferred_element_type=jnp.float32) + bqkv_ref[0]  # (S, 3D)
    q = qkv[:, :D].astype(jnp.bfloat16)            # 1/sqrt(dh) pre-folded into Q weights/bias
    k = qkv[:, D:2 * D].astype(jnp.bfloat16)
    v = qkv[:, 2 * D:].astype(jnp.bfloat16)

    # ---- per-head attention; contexts concatenated for ONE (S,D)@(D,D) out-projection ----
    # TODO(synk): for large head counts, move heads to a fori_loop / grid axis to bound
    # live ranges of the per-head (S,S) scores (vreg pressure on v7x).
    ctx_heads = []
    for h in range(heads):                         # static unroll (small H in this config)
        qh = q[:, h * dh:(h + 1) * dh]
        kh = k[:, h * dh:(h + 1) * dh]
        vh = v[:, h * dh:(h + 1) * dh]
        # scores = qh @ kh^T without materializing a transpose (NT dot_general).
        s = lax.dot_general(qh, kh, (((1,), (1,)), ((), ())),
                            preferred_element_type=jnp.float32)              # (S, S)
        s = jnp.where(key_valid, s, jnp.float32(-1e9))  # masked_fill(mask == 0, -1e9)
        s = s - jnp.max(s, axis=-1, keepdims=True)
        p = jnp.exp(s)
        p = p * pl.reciprocal(jnp.sum(p, axis=-1, keepdims=True), approx=True)
        ctx_heads.append(jnp.dot(p.astype(jnp.bfloat16), vh,
                                 preferred_element_type=jnp.float32))        # (S, dh)
    ctx = jnp.concatenate(ctx_heads, axis=-1).astype(jnp.bfloat16)           # (S, D)
    attn = jnp.dot(ctx, wo_ref[0], preferred_element_type=jnp.float32) + bo_ref[0]
    x1 = x + attn                                  # residual add fused (dropout = identity)

    # ---- LN2 -> FFN (Linear -> ReLU -> Linear) + residual ----
    # TODO(synk): for large d_ff on v7x, tile the FFN over F with an inner accumulator.
    y2 = _ln_rows(x1, ln2_g_ref[0], ln2_b_ref[0]).astype(jnp.bfloat16)
    h1 = jnp.dot(y2, w1_ref[0], preferred_element_type=jnp.float32) + b1_ref[0]
    h1 = jnp.maximum(h1, 0.0).astype(jnp.bfloat16)
    ff = jnp.dot(h1, w2_ref[0], preferred_element_type=jnp.float32) + b2_ref[0]
    x2 = x1 + ff
    res_ref[...] = x2                              # carry residual to the next layer

    # ---- final LayerNorm fused into the last layer's iteration ----
    @pl.when(l == pl.num_programs(1) - 1)
    def _():
        o_ref[0] = _ln_rows(x2, fin_g_ref[...], fin_b_ref[...])


# ----------------------------- wrapper -----------------------------

def _vmem_limit_bytes(*, S, D, F, heads):
    """Explicit scoped-VMEM budget: double-buffered per-layer weights + in-kernel activations."""
    d3 = 3 * D
    w_layer = (D * d3 + D * D + D * F + F * D) * 2          # bf16 matmul weights (one layer)
    b_layer = (d3 + F + 6 * D) * 4                          # f32 biases + LN params (one layer)
    io_blk = (S * D) * 4 * 2 + S * 4                        # x block, out block, mask block
    acts = (S * d3 + 4 * S * D + S * F + heads * S * S) * 4  # live f32 values inside kernel
    limit = 2 * (w_layer + b_layer) + 2 * io_blk + acts + (S * D) * 4 + (4 << 20)
    return int(min(limit, 64 << 20))                        # stay within v7x physical VMEM


def encoder_stack(p, x, mask3, *, heads):
    B, S, D = x.shape
    L = p["wqkv"].shape[0]
    F = p["w1"].shape[-1]
    d3 = 3 * D

    batch_map = lambda b, l: (b, 0, 0)     # per-batch blocks, resident across the layer axis
    layer_map = lambda b, l: (l, 0, 0)     # per-layer weights, streamed & double-buffered
    const_map = lambda b, l: (0, 0)        # final-LN params

    in_specs = [
        pl.BlockSpec((1, S, D), batch_map),      # x (embedded tokens)
        pl.BlockSpec((1, 1, S), batch_map),      # key-padding mask (int32)
        pl.BlockSpec((1, 1, D), layer_map),      # ln1 gamma
        pl.BlockSpec((1, 1, D), layer_map),      # ln1 beta
        pl.BlockSpec((1, D, d3), layer_map),     # fused Wqkv (bf16)
        pl.BlockSpec((1, 1, d3), layer_map),     # fused bqkv
        pl.BlockSpec((1, D, D), layer_map),      # Wo (bf16)
        pl.BlockSpec((1, 1, D), layer_map),      # bo
        pl.BlockSpec((1, 1, D), layer_map),      # ln2 gamma
        pl.BlockSpec((1, 1, D), layer_map),      # ln2 beta
        pl.BlockSpec((1, D, F), layer_map),      # W1 (bf16)
        pl.BlockSpec((1, 1, F), layer_map),      # b1
        pl.BlockSpec((1, F, D), layer_map),      # W2 (bf16)
        pl.BlockSpec((1, 1, D), layer_map),      # b2
        pl.BlockSpec((1, D), const_map),         # final LN gamma
        pl.BlockSpec((1, D), const_map),         # final LN beta
    ]

    return pl.pallas_call(
        functools.partial(_encoder_stack_kernel, heads=heads),
        out_shape=jax.ShapeDtypeStruct((B, S, D), jnp.float32),
        grid=(B, L),
        in_specs=in_specs,
        out_specs=pl.BlockSpec((1, S, D), batch_map),
        scratch_shapes=[pltpu.VMEM((S, D), jnp.float32)],       # residual stream carried over L
        compiler_params=pltpu.CompilerParams(
            dimension_semantics=("parallel", "arbitrary"),
            vmem_limit_bytes=_vmem_limit_bytes(S=S, D=D, F=F, heads=heads)),
    )(x, mask3,
      p["ln1_g"], p["ln1_b"], p["wqkv"], p["bqkv"], p["wo"], p["bo"],
      p["ln2_g"], p["ln2_b"], p["w1"], p["b1"], p["w2"], p["b2"],
      p["norm_g"], p["norm_b"])


# ----------------------------- model forward -----------------------------

def encoder_forward(params, tokens, mask, *, heads):
    # TODO(synk): the injected `embedding` module is opaque in the reference; modeled as a
    # plain learned lookup table (no sqrt(d_model) scaling / positional encoding).
    x = jnp.take(params["emb"], tokens, axis=0)            # (B, S, D) gather (glue)
    B, S = tokens.shape
    mask3 = mask.reshape(B, 1, S).astype(jnp.int32)        # key-padding mask, never broadcast in HBM
    return encoder_stack(params, x, mask3, heads=heads)


# ----------------------------- deterministic init -----------------------------

def init_params(key, vocab_size, d_model, d_ff, blocks_count, heads):
    dh = d_model // heads
    q_scale = 1.0 / math.sqrt(dh)

    def dense(k, din, dout):
        kw, kb = jax.random.split(k)
        w = jax.random.normal(kw, (din, dout), jnp.float32) * 0.02
        b = jax.random.normal(kb, (dout,), jnp.float32) * 0.02
        return w, b

    keys = jax.random.split(key, blocks_count + 1)
    emb = jax.random.normal(keys[0], (vocab_size, d_model), jnp.float32) * 0.02

    wqkv_l, bqkv_l, wo_l, bo_l, w1_l, b1_l, w2_l, b2_l = ([] for _ in range(8))
    for i in range(blocks_count):
        kk = jax.random.split(keys[1 + i], 6)
        wq, bq = dense(kk[0], d_model, d_model)
        wk, bk = dense(kk[1], d_model, d_model)
        wv, bv = dense(kk[2], d_model, d_model)
        wo, bo = dense(kk[3], d_model, d_model)
        w1, b1 = dense(kk[4], d_model, d_ff)
        w2, b2 = dense(kk[5], d_ff, d_model)
        # one-time param prep: fuse QKV and fold 1/sqrt(d_k) into the Q columns
        wqkv_l.append(jnp.concatenate([wq * q_scale, wk, wv], axis=1))   # (D, 3D)
        bqkv_l.append(jnp.concatenate([bq * q_scale, bk, bv], axis=0))   # (3D,)
        wo_l.append(wo); bo_l.append(bo)
        w1_l.append(w1); b1_l.append(b1)
        w2_l.append(w2); b2_l.append(b2)

    L, D, F = blocks_count, d_model, d_ff
    ones_ld = jnp.ones((L, 1, D), jnp.float32)
    zeros_ld = jnp.zeros((L, 1, D), jnp.float32)
    return dict(
        emb=emb,
        wqkv=jnp.stack(wqkv_l).astype(jnp.bfloat16),                  # (L, D, 3D)
        bqkv=jnp.stack(bqkv_l).reshape(L, 1, 3 * D),                  # (L, 1, 3D) f32
        wo=jnp.stack(wo_l).astype(jnp.bfloat16),                      # (L, D, D)
        bo=jnp.stack(bo_l).reshape(L, 1, D),                          # (L, 1, D)
        w1=jnp.stack(w1_l).astype(jnp.bfloat16),                      # (L, D, F)
        b1=jnp.stack(b1_l).reshape(L, 1, F),                          # (L, 1, F)
        w2=jnp.stack(w2_l).astype(jnp.bfloat16),                      # (L, F, D)
        b2=jnp.stack(b2_l).reshape(L, 1, D),                          # (L, 1, D)
        ln1_g=ones_ld, ln1_b=zeros_ld,
        ln2_g=ones_ld, ln2_b=zeros_ld,
        norm_g=jnp.ones((1, d_model), jnp.float32),
        norm_b=jnp.zeros((1, d_model), jnp.float32),
    )


# ----------------------------- main -----------------------------

if __name__ == "__main__":
    # B even (both v7x TensorCores busy); d_model / 3*d_model / d_ff are lane-dense (>=128).
    B, S = 2, 8
    vocab_size, d_model, d_ff, blocks_count, heads = 50, 128, 256, 2, 4

    key = jax.random.PRNGKey(0)
    pkey, tkey = jax.random.split(key)
    params = init_params(pkey, vocab_size, d_model, d_ff, blocks_count, heads)

    tokens = jax.random.randint(tkey, (B, S), 0, vocab_size, dtype=jnp.int32)
    lengths = jnp.array([S, 5], dtype=jnp.int32)
    mask = (jnp.arange(S)[None, :] < lengths[:, None]).astype(jnp.int32)  # (B, S) key-padding mask

    fwd = jax.jit(functools.partial(encoder_forward, heads=heads))
    out = fwd(params, tokens, mask)
    jax.block_until_ready(out)

    assert out.shape == (B, S, d_model), out.shape
    assert bool(jnp.all(jnp.isfinite(out)))
    print("KERNEL_OK")
</pallas_src>

<mosaic_0001>
module attributes {stable_mosaic.version = 11 : i64} {
  func.func @_encoder_stack_kernel(%arg0: i32, %arg1: i32, %arg2: memref<1x8x128xf32, #tpu.memory_space<vmem>>, %arg3: memref<1x1x8xi32, #tpu.memory_space<vmem>>, %arg4: memref<1x1x128xf32, #tpu.memory_space<vmem>>, %arg5: memref<1x1x128xf32, #tpu.memory_space<vmem>>, %arg6: memref<1x128x384xbf16, #tpu.memory_space<vmem>>, %arg7: memref<1x1x384xf32, #tpu.memory_space<vmem>>, %arg8: memref<1x128x128xbf16, #tpu.memory_space<vmem>>, %arg9: memref<1x1x128xf32, #tpu.memory_space<vmem>>, %arg10: memref<1x1x128xf32, #tpu.memory_space<vmem>>, %arg11: memref<1x1x128xf32, #tpu.memory_space<vmem>>, %arg12: memref<1x128x256xbf16, #tpu.memory_space<vmem>>, %arg13: memref<1x1x256xf32, #tpu.memory_space<vmem>>, %arg14: memref<1x256x128xbf16, #tpu.memory_space<vmem>>, %arg15: memref<1x1x128xf32, #tpu.memory_space<vmem>>, %arg16: memref<1x128xf32, #tpu.memory_space<vmem>>, %arg17: memref<1x128xf32, #tpu.memory_space<vmem>>, %arg18: memref<1x8x128xf32, #tpu.memory_space<vmem>>, %arg19: memref<8x128xf32, #tpu.memory_space<vmem>>) attributes {dimension_semantics = [#tpu.dimension_semantics<parallel>, #tpu.dimension_semantics<arbitrary>], iteration_bounds = array<i64: 2, 2>, scalar_prefetch = 0 : i64, scratch_operands = 1 : i64, tpu.core_type = #tpu.core_type<tc>, window_params = [{transform_indices = @transform_0, window_bounds = array<i64: 1, 8, 128>}, {transform_indices = @transform_1, window_bounds = array<i64: 1, 1, 8>}, {transform_indices = @transform_2, window_bounds = array<i64: 1, 1, 128>}, {transform_indices = @transform_3, window_bounds = array<i64: 1, 1, 128>}, {transform_indices = @transform_4, window_bounds = array<i64: 1, 128, 384>}, {transform_indices = @transform_5, window_bounds = array<i64: 1, 1, 384>}, {transform_indices = @transform_6, window_bounds = array<i64: 1, 128, 128>}, {transform_indices = @transform_7, window_bounds = array<i64: 1, 1, 128>}, {transform_indices = @transform_8, window_bounds = array<i64: 1, 1, 128>}, {transform_indices = @transform_9, window_bounds = array<i64: 1, 1, 128>}, {transform_indices = @transform_10, window_bounds = array<i64: 1, 128, 256>}, {transform_indices = @transform_11, window_bounds = array<i64: 1, 1, 256>}, {transform_indices = @transform_12, window_bounds = array<i64: 1, 256, 128>}, {transform_indices = @transform_13, window_bounds = array<i64: 1, 1, 128>}, {pipeline_mode = #tpu.pipeline_mode<synchronous>, transform_indices = @transform_14, window_bounds = array<i64: 1, 128>}, {pipeline_mode = #tpu.pipeline_mode<synchronous>, transform_indices = @transform_15, window_bounds = array<i64: 1, 128>}, {transform_indices = @transform_16, window_bounds = array<i64: 1, 8, 128>}]} {
    %c0_i32 = arith.constant 0 : i32
    %0 = arith.cmpi eq, %arg1, %c0_i32 : i32
    %1 = arith.extui %0 : i1 to i32
    %c0_i32_0 = arith.constant 0 : i32
    %2 = arith.cmpi ne, %1, %c0_i32_0 : i32
    scf.if %2 {
      %c0_81 = arith.constant 0 : index
      %c0_82 = arith.constant 0 : index
      %c0_83 = arith.constant 0 : index
      %191 = vector.load %arg2[%c0_81, %c0_82, %c0_83] : memref<1x8x128xf32, #tpu.memory_space<vmem>>, vector<1x8x128xf32>
      %192 = vector.shape_cast %191 : vector<1x8x128xf32> to vector<8x128xf32>
      %c0_84 = arith.constant 0 : index
      %c0_85 = arith.constant 0 : index
      %193 = vector.load %arg19[%c0_84, %c0_85] : memref<8x128xf32, #tpu.memory_space<vmem>>, vector<8x128xf32>
      tpu.vector_store %arg19[%c0_84, %c0_85], %192 {strides = array<i32>} : memref<8x128xf32, #tpu.memory_space<vmem>>, vector<8x128xf32>,
    } else {
    }
    %c0 = arith.constant 0 : index
    %c0_1 = arith.constant 0 : index
    %3 = vector.load %arg19[%c0, %c0_1] : memref<8x128xf32, #tpu.memory_space<vmem>>, vector<8x128xf32>
    %c0_2 = arith.constant 0 : index
    %c0_3 = arith.constant 0 : index
    %c0_4 = arith.constant 0 : index
    %4 = vector.load %arg3[%c0_2, %c0_3, %c0_4] : memref<1x1x8xi32, #tpu.memory_space<vmem>>, vector<1x1x8xi32>
    %5 = vector.shape_cast %4 : vector<1x1x8xi32> to vector<1x8xi32>
    %c0_i32_5 = arith.constant 0 : i32
    %6 = vector.broadcast %c0_i32_5 : i32 to vector<1x8xi32>
    %7 = arith.cmpi ne, %5, %6 : vector<1x8xi32>
    %c0_6 = arith.constant 0 : index
    %c0_7 = arith.constant 0 : index
    %c0_8 = arith.constant 0 : index
    %8 = vector.load %arg4[%c0_6, %c0_7, %c0_8] : memref<1x1x128xf32, #tpu.memory_space<vmem>>, vector<1x1x128xf32>
    %9 = vector.shape_cast %8 : vector<1x1x128xf32> to vector<1x128xf32>
    %c0_9 = arith.constant 0 : index
    %c0_10 = arith.constant 0 : index
    %c0_11 = arith.constant 0 : index
    %10 = vector.load %arg5[%c0_9, %c0_10, %c0_11] : memref<1x1x128xf32, #tpu.memory_space<vmem>>, vector<1x1x128xf32>
    %11 = vector.shape_cast %10 : vector<1x1x128xf32> to vector<1x128xf32>
    %cst = arith.constant dense<0.000000e+00> : vector<8xf32>
    %12 = vector.multi_reduction <add>, %3, %cst [1] : vector<8x128xf32> to vector<8xf32>
    %13 = vector.shape_cast %12 : vector<8xf32> to vector<8x1xf32>
    %cst_12 = arith.constant 1.280000e+02 : f32
    %14 = vector.broadcast %cst_12 : f32 to vector<8x1xf32>
    %15 = arith.divf %13, %14 : vector<8x1xf32>
    %16 = vector.broadcast %15 : vector<8x1xf32> to vector<8x128xf32>
    %17 = arith.subf %3, %16 : vector<8x128xf32>
    %18 = arith.mulf %17, %17 : vector<8x128xf32>
    %cst_13 = arith.constant dense<0.000000e+00> : vector<8xf32>
    %19 = vector.multi_reduction <add>, %18, %cst_13 [1] : vector<8x128xf32> to vector<8xf32>
    %20 = vector.shape_cast %19 : vector<8xf32> to vector<8x1xf32>
    %cst_14 = arith.constant 0.00787401571 : f32
    %21 = vector.broadcast %cst_14 : f32 to vector<8x1xf32>
    %22 = arith.mulf %20, %21 : vector<8x1xf32>
    %23 = math.sqrt %22 : vector<8x1xf32>
    %cst_15 = arith.constant 9.99999997E-7 : f32
    %24 = vector.broadcast %cst_15 : f32 to vector<8x1xf32>
    %25 = arith.addf %23, %24 : vector<8x1xf32>
    %cst_16 = arith.constant 1.000000e+00 : f32
    %26 = vector.broadcast %cst_16 : f32 to vector<8x1xf32>
    %27 = arith.divf %26, %25 : vector<8x1xf32>
    %28 = vector.broadcast %15 : vector<8x1xf32> to vector<8x128xf32>
    %29 = arith.subf %3, %28 : vector<8x128xf32>
    %30 = vector.broadcast %9 : vector<1x128xf32> to vector<8x128xf32>
    %31 = arith.mulf %30, %29 : vector<8x128xf32>
    %32 = vector.broadcast %27 : vector<8x1xf32> to vector<8x128xf32>
    %33 = arith.mulf %31, %32 : vector<8x128xf32>
    %34 = vector.broadcast %11 : vector<1x128xf32> to vector<8x128xf32>
    %35 = arith.addf %33, %34 : vector<8x128xf32>
    %36 = arith.truncf %35 : vector<8x128xf32> to vector<8x128xbf16>
    %c0_17 = arith.constant 0 : index
    %c0_18 = arith.constant 0 : index
    %c0_19 = arith.constant 0 : index
    %37 = vector.load %arg6[%c0_17, %c0_18, %c0_19] : memref<1x128x384xbf16, #tpu.memory_space<vmem>>, vector<1x128x384xbf16>
    %38 = vector.shape_cast %37 : vector<1x128x384xbf16> to vector<128x384xbf16>
    %cst_20 = arith.constant dense<0.000000e+00> : vector<8x384xf32>
    %39 = tpu.matmul %36, %38, %cst_20 {dimension_numbers = #tpu.dot_dimension_numbers<[1], [0], [0], [1], [0, 0, 1, 1], [], []>} : vector<8x128xbf16>, vector<128x384xbf16>, vector<8x384xf32> -> vector<8x384xf32>
    %c0_21 = arith.constant 0 : index
    %c0_22 = arith.constant 0 : index
    %c0_23 = arith.constant 0 : index
    %40 = vector.load %arg7[%c0_21, %c0_22, %c0_23] : memref<1x1x384xf32, #tpu.memory_space<vmem>>, vector<1x1x384xf32>
    %41 = vector.shape_cast %40 : vector<1x1x384xf32> to vector<1x384xf32>
    %42 = vector.broadcast %41 : vector<1x384xf32> to vector<8x384xf32>
    %43 = arith.addf %39, %42 : vector<8x384xf32>
    %44 = vector.extract_strided_slice %43 {offsets = [0, 0], sizes = [8, 128], strides = [1, 1]} : vector<8x384xf32> to vector<8x128xf32>
    %45 = arith.truncf %44 : vector<8x128xf32> to vector<8x128xbf16>
    %46 = vector.extract_strided_slice %43 {offsets = [0, 128], sizes = [8, 128], strides = [1, 1]} : vector<8x384xf32> to vector<8x128xf32>
    %47 = arith.truncf %46 : vector<8x128xf32> to vector<8x128xbf16>
    %48 = vector.extract_strided_slice %43 {offsets = [0, 256], sizes = [8, 128], strides = [1, 1]} : vector<8x384xf32> to vector<8x128xf32>
    %49 = arith.truncf %48 : vector<8x128xf32> to vector<8x128xbf16>
    %50 = vector.extract_strided_slice %45 {offsets = [0, 0], sizes = [8, 32], strides = [1, 1]} : vector<8x128xbf16> to vector<8x32xbf16>
    %51 = vector.extract_strided_slice %47 {offsets = [0, 0], sizes = [8, 32], strides = [1, 1]} : vector<8x128xbf16> to vector<8x32xbf16>
    %52 = vector.extract_strided_slice %49 {offsets = [0, 0], sizes = [8, 32], strides = [1, 1]} : vector<8x128xbf16> to vector<8x32xbf16>
    %cst_24 = arith.constant dense<0.000000e+00> : vector<8x8xf32>
    %53 = tpu.matmul %50, %51, %cst_24 {dimension_numbers = #tpu.dot_dimension_numbers<[1], [1], [0], [0], [0, 0, 1, 0], [], []>} : vector<8x32xbf16>, vector<8x32xbf16>, vector<8x8xf32> -> vector<8x8xf32>
    %cst_25 = arith.constant -1.000000e+09 : f32
    %54 = vector.shape_cast %7 : vector<1x8xi1> to vector<1x8xi1>
    %55 = vector.broadcast %54 : vector<1x8xi1> to vector<8x8xi1>
    %56 = vector.broadcast %cst_25 : f32 to vector<8x8xf32>
    %57 = arith.select %55, %53, %56 : vector<8x8xi1>, vector<8x8xf32>
    %cst_26 = arith.constant dense<0xFF800000> : vector<8xf32>
    %58 = vector.multi_reduction <maximumf>, %57, %cst_26 [1] : vector<8x8xf32> to vector<8xf32>
    %59 = vector.shape_cast %58 : vector<8xf32> to vector<8x1xf32>
    %60 = vector.broadcast %59 : vector<8x1xf32> to vector<8x8xf32>
    %61 = arith.subf %57, %60 : vector<8x8xf32>
    %62 = math.exp %61 : vector<8x8xf32>
    %cst_27 = arith.constant dense<0.000000e+00> : vector<8xf32>
    %63 = vector.multi_reduction <add>, %62, %cst_27 [1] : vector<8x8xf32> to vector<8xf32>
    %64 = vector.shape_cast %63 : vector<8xf32> to vector<8x1xf32>
    %65 = tpu.reciprocal %64 {approx = true} : vector<8x1xf32> -> vector<8x1xf32>
    %66 = vector.broadcast %65 : vector<8x1xf32> to vector<8x8xf32>
    %67 = arith.mulf %62, %66 : vector<8x8xf32>
    %68 = arith.truncf %67 : vector<8x8xf32> to vector<8x8xbf16>
    %cst_28 = arith.constant dense<0.000000e+00> : vector<8x32xf32>
    %69 = tpu.matmul %68, %52, %cst_28 {dimension_numbers = #tpu.dot_dimension_numbers<[1], [0], [0], [1], [0, 0, 1, 1], [], []>} : vector<8x8xbf16>, vector<8x32xbf16>, vector<8x32xf32> -> vector<8x32xf32>
    %70 = vector.extract_strided_slice %45 {offsets = [0, 32], sizes = [8, 32], strides = [1, 1]} : vector<8x128xbf16> to vector<8x32xbf16>
    %71 = vector.extract_strided_slice %47 {offsets = [0, 32], sizes = [8, 32], strides = [1, 1]} : vector<8x128xbf16> to vector<8x32xbf16>
    %72 = vector.extract_strided_slice %49 {offsets = [0, 32], sizes = [8, 32], strides = [1, 1]} : vector<8x128xbf16> to vector<8x32xbf16>
    %cst_29 = arith.constant dense<0.000000e+00> : vector<8x8xf32>
    %73 = tpu.matmul %70, %71, %cst_29 {dimension_numbers = #tpu.dot_dimension_numbers<[1], [1], [0], [0], [0, 0, 1, 0], [], []>} : vector<8x32xbf16>, vector<8x32xbf16>, vector<8x8xf32> -> vector<8x8xf32>
    %cst_30 = arith.constant -1.000000e+09 : f32
    %74 = vector.shape_cast %7 : vector<1x8xi1> to vector<1x8xi1>
    %75 = vector.broadcast %74 : vector<1x8xi1> to vector<8x8xi1>
    %76 = vector.broadcast %cst_30 : f32 to vector<8x8xf32>
    %77 = arith.select %75, %73, %76 : vector<8x8xi1>, vector<8x8xf32>
    %cst_31 = arith.constant dense<0xFF800000> : vector<8xf32>
    %78 = vector.multi_reduction <maximumf>, %77, %cst_31 [1] : vector<8x8xf32> to vector<8xf32>
    %79 = vector.shape_cast %78 : vector<8xf32> to vector<8x1xf32>
    %80 = vector.broadcast %79 : vector<8x1xf32> to vector<8x8xf32>
    %81 = arith.subf %77, %80 : vector<8x8xf32>
    %82 = math.exp %81 : vector<8x8xf32>
    %cst_32 = arith.constant dense<0.000000e+00> : vector<8xf32>
    %83 = vector.multi_reduction <add>, %82, %cst_32 [1] : vector<8x8xf32> to vector<8xf32>
    %84 = vector.shape_cast %83 : vector<8xf32> to vector<8x1xf32>
    %85 = tpu.reciprocal %84 {approx = true} : vector<8x1xf32> -> vector<8x1xf32>
    %86 = vector.broadcast %85 : vector<8x1xf32> to vector<8x8xf32>
    %87 = arith.mulf %82, %86 : vector<8x8xf32>
    %88 = arith.truncf %87 : vector<8x8xf32> to vector<8x8xbf16>
    %cst_33 = arith.constant dense<0.000000e+00> : vector<8x32xf32>
    %89 = tpu.matmul %88, %72, %cst_33 {dimension_numbers = #tpu.dot_dimension_numbers<[1], [0], [0], [1], [0, 0, 1, 1], [], []>} : vector<8x8xbf16>, vector<8x32xbf16>, vector<8x32xf32> -> vector<8x32xf32>
    %90 = vector.extract_strided_slice %45 {offsets = [0, 64], sizes = [8, 32], strides = [1, 1]} : vector<8x128xbf16> to vector<8x32xbf16>
    %91 = vector.extract_strided_slice %47 {offsets = [0, 64], sizes = [8, 32], strides = [1, 1]} : vector<8x128xbf16> to vector<8x32xbf16>
    %92 = vector.extract_strided_slice %49 {offsets = [0, 64], sizes = [8, 32], strides = [1, 1]} : vector<8x128xbf16> to vector<8x32xbf16>
    %cst_34 = arith.constant dense<0.000000e+00> : vector<8x8xf32>
    %93 = tpu.matmul %90, %91, %cst_34 {dimension_numbers = #tpu.dot_dimension_numbers<[1], [1], [0], [0], [0, 0, 1, 0], [], []>} : vector<8x32xbf16>, vector<8x32xbf16>, vector<8x8xf32> -> vector<8x8xf32>
    %cst_35 = arith.constant -1.000000e+09 : f32
    %94 = vector.shape_cast %7 : vector<1x8xi1> to vector<1x8xi1>
    %95 = vector.broadcast %94 : vector<1x8xi1> to vector<8x8xi1>
    %96 = vector.broadcast %cst_35 : f32 to vector<8x8xf32>
    %97 = arith.select %95, %93, %96 : vector<8x8xi1>, vector<8x8xf32>
    %cst_36 = arith.constant dense<0xFF800000> : vector<8xf32>
    %98 = vector.multi_reduction <maximumf>, %97, %cst_36 [1] : vector<8x8xf32> to vector<8xf32>
    %99 = vector.shape_cast %98 : vector<8xf32> to vector<8x1xf32>
    %100 = vector.broadcast %99 : vector<8x1xf32> to vector<8x8xf32>
    %101 = arith.subf %97, %100 : vector<8x8xf32>
    %102 = math.exp %101 : vector<8x8xf32>
    %cst_37 = arith.constant dense<0.000000e+00> : vector<8xf32>
    %103 = vector.multi_reduction <add>, %102, %cst_37 [1] : vector<8x8xf32> to vector<8xf32>
    %104 = vector.shape_cast %103 : vector<8xf32> to vector<8x1xf32>
    %105 = tpu.reciprocal %104 {approx = true} : vector<8x1xf32> -> vector<8x1xf32>
    %106 = vector.broadcast %105 : vector<8x1xf32> to vector<8x8xf32>
    %107 = arith.mulf %102, %106 : vector<8x8xf32>
    %108 = arith.truncf %107 : vector<8x8xf32> to vector<8x8xbf16>
    %cst_38 = arith.constant dense<0.000000e+00> : vector<8x32xf32>
    %109 = tpu.matmul %108, %92, %cst_38 {dimension_numbers = #tpu.dot_dimension_numbers<[1], [0], [0], [1], [0, 0, 1, 1], [], []>} : vector<8x8xbf16>, vector<8x32xbf16>, vector<8x32xf32> -> vector<8x32xf32>
    %110 = vector.extract_strided_slice %45 {offsets = [0, 96], sizes = [8, 32], strides = [1, 1]} : vector<8x128xbf16> to vector<8x32xbf16>
    %111 = vector.extract_strided_slice %47 {offsets = [0, 96], sizes = [8, 32], strides = [1, 1]} : vector<8x128xbf16> to vector<8x32xbf16>
    %112 = vector.extract_strided_slice %49 {offsets = [0, 96], sizes = [8, 32], strides = [1, 1]} : vector<8x128xbf16> to vector<8x32xbf16>
    %cst_39 = arith.constant dense<0.000000e+00> : vector<8x8xf32>
    %113 = tpu.matmul %110, %111, %cst_39 {dimension_numbers = #tpu.dot_dimension_numbers<[1], [1], [0], [0], [0, 0, 1, 0], [], []>} : vector<8x32xbf16>, vector<8x32xbf16>, vector<8x8xf32> -> vector<8x8xf32>
    %cst_40 = arith.constant -1.000000e+09 : f32
    %114 = vector.shape_cast %7 : vector<1x8xi1> to vector<1x8xi1>
    %115 = vector.broadcast %114 : vector<1x8xi1> to vector<8x8xi1>
    %116 = vector.broadcast %cst_40 : f32 to vector<8x8xf32>
    %117 = arith.select %115, %113, %116 : vector<8x8xi1>, vector<8x8xf32>
    %cst_41 = arith.constant dense<0xFF800000> : vector<8xf32>
    %118 = vector.multi_reduction <maximumf>, %117, %cst_41 [1] : vector<8x8xf32> to vector<8xf32>
    %119 = vector.shape_cast %118 : vector<8xf32> to vector<8x1xf32>
    %120 = vector.broadcast %119 : vector<8x1xf32> to vector<8x8xf32>
    %121 = arith.subf %117, %120 : vector<8x8xf32>
    %122 = math.exp %121 : vector<8x8xf32>
    %cst_42 = arith.constant dense<0.000000e+00> : vector<8xf32>
    %123 = vector.multi_reduction <add>, %122, %cst_42 [1] : vector<8x8xf32> to vector<8xf32>
    %124 = vector.shape_cast %123 : vector<8xf32> to vector<8x1xf32>
    %125 = tpu.reciprocal %124 {approx = true} : vector<8x1xf32> -> vector<8x1xf32>
    %126 = vector.broadcast %125 : vector<8x1xf32> to vector<8x8xf32>
    %127 = arith.mulf %122, %126 : vector<8x8xf32>
    %128 = arith.truncf %127 : vector<8x8xf32> to vector<8x8xbf16>
    %cst_43 = arith.constant dense<0.000000e+00> : vector<8x32xf32>
    %129 = tpu.matmul %128, %112, %cst_43 {dimension_numbers = #tpu.dot_dimension_numbers<[1], [0], [0], [1], [0, 0, 1, 1], [], []>} : vector<8x8xbf16>, vector<8x32xbf16>, vector<8x32xf32> -> vector<8x32xf32>
    %130 = tpu.concatenate %69, %89, %109, %129 in 1 : vector<8x32xf32>, vector<8x32xf32>, vector<8x32xf32>, vector<8x32xf32> -> vector<8x128xf32>
    %131 = arith.truncf %130 : vector<8x128xf32> to vector<8x128xbf16>
    %c0_44 = arith.constant 0 : index
    %c0_45 = arith.constant 0 : index
    %c0_46 = arith.constant 0 : index
    %132 = vector.load %arg8[%c0_44, %c0_45, %c0_46] : memref<1x128x128xbf16, #tpu.memory_space<vmem>>, vector<1x128x128xbf16>
    %133 = vector.shape_cast %132 : vector<1x128x128xbf16> to vector<128x128xbf16>
    %cst_47 = arith.constant dense<0.000000e+00> : vector<8x128xf32>
    %134 = tpu.matmul %131, %133, %cst_47 {dimension_numbers = #tpu.dot_dimension_numbers<[1], [0], [0], [1], [0, 0, 1, 1], [], []>} : vector<8x128xbf16>, vector<128x128xbf16>, vector<8x128xf32> -> vector<8x128xf32>
    %c0_48 = arith.constant 0 : index
    %c0_49 = arith.constant 0 : index
    %c0_50 = arith.constant 0 : index
    %135 = vector.load %arg9[%c0_48, %c0_49, %c0_50] : memref<1x1x128xf32, #tpu.memory_space<vmem>>, vector<1x1x128xf32>
    %136 = vector.shape_cast %135 : vector<1x1x128xf32> to vector<1x128xf32>
    %137 = vector.broadcast %136 : vector<1x128xf32> to vector<8x128xf32>
    %138 = arith.addf %134, %137 : vector<8x128xf32>
    %139 = arith.addf %3, %138 : vector<8x128xf32>
    %c0_51 = arith.constant 0 : index
    %c0_52 = arith.constant 0 : index
    %c0_53 = arith.constant 0 : index
    %140 = vector.load %arg10[%c0_51, %c0_52, %c0_53] : memref<1x1x128xf32, #tpu.memory_space<vmem>>, vector<1x1x128xf32>
    %141 = vector.shape_cast %140 : vector<1x1x128xf32> to vector<1x128xf32>
    %c0_54 = arith.constant 0 : index
    %c0_55 = arith.constant 0 : index
    %c0_56 = arith.constant 0 : index
    %142 = vector.load %arg11[%c0_54, %c0_55, %c0_56] : memref<1x1x128xf32, #tpu.memory_space<vmem>>, vector<1x1x128xf32>
    %143 = vector.shape_cast %142 : vector<1x1x128xf32> to vector<1x128xf32>
    %cst_57 = arith.constant dense<0.000000e+00> : vector<8xf32>
    %144 = vector.multi_reduction <add>, %139, %cst_57 [1] : vector<8x128xf32> to vector<8xf32>
    %145 = vector.shape_cast %144 : vector<8xf32> to vector<8x1xf32>
    %cst_58 = arith.constant 1.280000e+02 : f32
    %146 = vector.broadcast %cst_58 : f32 to vector<8x1xf32>
    %147 = arith.divf %145, %146 : vector<8x1xf32>
    %148 = vector.broadcast %147 : vector<8x1xf32> to vector<8x128xf32>
    %149 = arith.subf %139, %148 : vector<8x128xf32>
    %150 = arith.mulf %149, %149 : vector<8x128xf32>
    %cst_59 = arith.constant dense<0.000000e+00> : vector<8xf32>
    %151 = vector.multi_reduction <add>, %150, %cst_59 [1] : vector<8x128xf32> to vector<8xf32>
    %152 = vector.shape_cast %151 : vector<8xf32> to vector<8x1xf32>
    %cst_60 = arith.constant 0.00787401571 : f32
    %153 = vector.broadcast %cst_60 : f32 to vector<8x1xf32>
    %154 = arith.mulf %152, %153 : vector<8x1xf32>
    %155 = math.sqrt %154 : vector<8x1xf32>
    %cst_61 = arith.constant 9.99999997E-7 : f32
    %156 = vector.broadcast %cst_61 : f32 to vector<8x1xf32>
    %157 = arith.addf %155, %156 : vector<8x1xf32>
    %cst_62 = arith.constant 1.000000e+00 : f32
    %158 = vector.broadcast %cst_62 : f32 to vector<8x1xf32>
    %159 = arith.divf %158, %157 : vector<8x1xf32>
    %160 = vector.broadcast %147 : vector<8x1xf32> to vector<8x128xf32>
    %161 = arith.subf %139, %160 : vector<8x128xf32>
    %162 = vector.broadcast %141 : vector<1x128xf32> to vector<8x128xf32>
    %163 = arith.mulf %162, %161 : vector<8x128xf32>
    %164 = vector.broadcast %159 : vector<8x1xf32> to vector<8x128xf32>
    %165 = arith.mulf %163, %164 : vector<8x128xf32>
    %166 = vector.broadcast %143 : vector<1x128xf32> to vector<8x128xf32>
    %167 = arith.addf %165, %166 : vector<8x128xf32>
    %168 = arith.truncf %167 : vector<8x128xf32> to vector<8x128xbf16>
    %c0_63 = arith.constant 0 : index
    %c0_64 = arith.constant 0 : index
    %c0_65 = arith.constant 0 : index
    %169 = vector.load %arg12[%c0_63, %c0_64, %c0_65] : memref<1x128x256xbf16, #tpu.memory_space<vmem>>, vector<1x128x256xbf16>
    %170 = vector.shape_cast %169 : vector<1x128x256xbf16> to vector<128x256xbf16>
    %cst_66 = arith.constant dense<0.000000e+00> : vector<8x256xf32>
    %171 = tpu.matmul %168, %170, %cst_66 {dimension_numbers = #tpu.dot_dimension_numbers<[1], [0], [0], [1], [0, 0, 1, 1], [], []>} : vector<8x128xbf16>, vector<128x256xbf16>, vector<8x256xf32> -> vector<8x256xf32>
    %c0_67 = arith.constant 0 : index
    %c0_68 = arith.constant 0 : index
    %c0_69 = arith.constant 0 : index
    %172 = vector.load %arg13[%c0_67, %c0_68, %c0_69] : memref<1x1x256xf32, #tpu.memory_space<vmem>>, vector<1x1x256xf32>
    %173 = vector.shape_cast %172 : vector<1x1x256xf32> to vector<1x256xf32>
    %174 = vector.broadcast %173 : vector<1x256xf32> to vector<8x256xf32>
    %175 = arith.addf %171, %174 : vector<8x256xf32>
    %cst_70 = arith.constant 0.000000e+00 : f32
    %176 = vector.broadcast %cst_70 : f32 to vector<8x256xf32>
    %177 = arith.maximumf %175, %176 : vector<8x256xf32>
    %178 = arith.truncf %177 : vector<8x256xf32> to vector<8x256xbf16>
    %c0_71 = arith.constant 0 : index
    %c0_72 = arith.constant 0 : index
    %c0_73 = arith.constant 0 : index
    %179 = vector.load %arg14[%c0_71, %c0_72, %c0_73] : memref<1x256x128xbf16, #tpu.memory_space<vmem>>, vector<1x256x128xbf16>
    %180 = vector.shape_cast %179 : vector<1x256x128xbf16> to vector<256x128xbf16>
    %cst_74 = arith.constant dense<0.000000e+00> : vector<8x128xf32>
    %181 = tpu.matmul %178, %180, %cst_74 {dimension_numbers = #tpu.dot_dimension_numbers<[1], [0], [0], [1], [0, 0, 1, 1], [], []>} : vector<8x256xbf16>, vector<256x128xbf16>, vector<8x128xf32> -> vector<8x128xf32>
    %c0_75 = arith.constant 0 : index
    %c0_76 = arith.constant 0 : index
    %c0_77 = arith.constant 0 : index
    %182 = vector.load %arg15[%c0_75, %c0_76, %c0_77] : memref<1x1x128xf32, #tpu.memory_space<vmem>>, vector<1x1x128xf32>
    %183 = vector.shape_cast %182 : vector<1x1x128xf32> to vector<1x128xf32>
    %184 = vector.broadcast %183 : vector<1x128xf32> to vector<8x128xf32>
    %185 = arith.addf %181, %184 : vector<8x128xf32>
    %186 = arith.addf %139, %185 : vector<8x128xf32>
    %c0_78 = arith.constant 0 : index
    %c0_79 = arith.constant 0 : index
    %187 = vector.load %arg19[%c0_78, %c0_79] : memref<8x128xf32, #tpu.memory_space<vmem>>, vector<8x128xf32>
    tpu.vector_store %arg19[%c0_78, %c0_79], %186 {strides = array<i32>} : memref<8x128xf32, #tpu.memory_space<vmem>>, vector<8x128xf32>,
    %c1_i32 = arith.constant 1 : i32
    %188 = arith.cmpi eq, %arg1, %c1_i32 : i32
    %189 = arith.extui %188 : i1 to i32
    %c0_i32_80 = arith.constant 0 : i32
    %190 = arith.cmpi ne, %189, %c0_i32_80 : i32
    scf.if %190 {
      %c0_81 = arith.constant 0 : index
      %c0_82 = arith.constant 0 : index
      %191 = vector.load %arg16[%c0_81, %c0_82] : memref<1x128xf32, #tpu.memory_space<vmem>>, vector<1x128xf32>
      %c0_83 = arith.constant 0 : index
      %c0_84 = arith.constant 0 : index
      %192 = vector.load %arg17[%c0_83, %c0_84] : memref<1x128xf32, #tpu.memory_space<vmem>>, vector<1x128xf32>
      %cst_85 = arith.constant dense<0.000000e+00> : vector<8xf32>
      %193 = vector.multi_reduction <add>, %186, %cst_85 [1] : vector<8x128xf32> to vector<8xf32>
      %194 = vector.shape_cast %193 : vector<8xf32> to vector<8x1xf32>
      %cst_86 = arith.constant 1.280000e+02 : f32
      %195 = vector.broadcast %cst_86 : f32 to vector<8x1xf32>
      %196 = arith.divf %194, %195 : vector<8x1xf32>
      %197 = vector.broadcast %196 : vector<8x1xf32> to vector<8x128xf32>
      %198 = arith.subf %186, %197 : vector<8x128xf32>
      %199 = arith.mulf %198, %198 : vector<8x128xf32>
      %cst_87 = arith.constant dense<0.000000e+00> : vector<8xf32>
      %200 = vector.multi_reduction <add>, %199, %cst_87 [1] : vector<8x128xf32> to vector<8xf32>
      %201 = vector.shape_cast %200 : vector<8xf32> to vector<8x1xf32>
      %cst_88 = arith.constant 0.00787401571 : f32
      %202 = vector.broadcast %cst_88 : f32 to vector<8x1xf32>
      %203 = arith.mulf %201, %202 : vector<8x1xf32>
      %204 = math.sqrt %203 : vector<8x1xf32>
      %cst_89 = arith.constant 9.99999997E-7 : f32
      %205 = vector.broadcast %cst_89 : f32 to vector<8x1xf32>
      %206 = arith.addf %204, %205 : vector<8x1xf32>
      %cst_90 = arith.constant 1.000000e+00 : f32
      %207 = vector.broadcast %cst_90 : f32 to vector<8x1xf32>
      %208 = arith.divf %207, %206 : vector<8x1xf32>
      %209 = vector.broadcast %196 : vector<8x1xf32> to vector<8x128xf32>
      %210 = arith.subf %186, %209 : vector<8x128xf32>
      %211 = vector.broadcast %191 : vector<1x128xf32> to vector<8x128xf32>
      %212 = arith.mulf %211, %210 : vector<8x128xf32>
      %213 = vector.broadcast %208 : vector<8x1xf32> to vector<8x128xf32>
      %214 = arith.mulf %212, %213 : vector<8x128xf32>
      %215 = vector.broadcast %192 : vector<1x128xf32> to vector<8x128xf32>
      %216 = arith.addf %214, %215 : vector<8x128xf32>
      %c0_91 = arith.constant 0 : index
      %c0_92 = arith.constant 0 : index
      %c0_93 = arith.constant 0 : index
      %217 = vector.load %arg18[%c0_91, %c0_92, %c0_93] : memref<1x8x128xf32, #tpu.memory_space<vmem>>, vector<1x8x128xf32>
      %218 = vector.shape_cast %217 : vector<1x8x128xf32> to vector<8x128xf32>
      %219 = vector.shape_cast %216 : vector<8x128xf32> to vector<1x8x128xf32>
      tpu.vector_store %arg18[%c0_91, %c0_92, %c0_93], %219 {strides = array<i32>} : memref<1x8x128xf32, #tpu.memory_space<vmem>>, vector<1x8x128xf32>,
    } else {
    }
    return
  }
  func.func @transform_0(%arg0: i32, %arg1: i32) -> (i32, i32, i32) {
    %c0_i32 = arith.constant 0 : i32
    %c0_i32_0 = arith.constant 0 : i32
    %c0_i32_1 = arith.constant 0 : i32
    return %arg0, %c0_i32, %c0_i32_0 : i32, i32, i32
  }
  func.func @transform_1(%arg0: i32, %arg1: i32) -> (i32, i32, i32) {
    %c0_i32 = arith.constant 0 : i32
    %c0_i32_0 = arith.constant 0 : i32
    %c0_i32_1 = arith.constant 0 : i32
    return %arg0, %c0_i32, %c0_i32_0 : i32, i32, i32
  }
  func.func @transform_2(%arg0: i32, %arg1: i32) -> (i32, i32, i32) {
    %c0_i32 = arith.constant 0 : i32
    %c0_i32_0 = arith.constant 0 : i32
    %c0_i32_1 = arith.constant 0 : i32
    return %arg1, %c0_i32, %c0_i32_0 : i32, i32, i32
  }
  func.func @transform_3(%arg0: i32, %arg1: i32) -> (i32, i32, i32) {
    %c0_i32 = arith.constant 0 : i32
    %c0_i32_0 = arith.constant 0 : i32
    %c0_i32_1 = arith.constant 0 : i32
    return %arg1, %c0_i32, %c0_i32_0 : i32, i32, i32
  }
  func.func @transform_4(%arg0: i32, %arg1: i32) -> (i32, i32, i32) {
    %c0_i32 = arith.constant 0 : i32
    %c0_i32_0 = arith.constant 0 : i32
    %c0_i32_1 = arith.constant 0 : i32
    return %arg1, %c0_i32, %c0_i32_0 : i32, i32, i32
  }
  func.func @transform_5(%arg0: i32, %arg1: i32) -> (i32, i32, i32) {
    %c0_i32 = arith.constant 0 : i32
    %c0_i32_0 = arith.constant 0 : i32
    %c0_i32_1 = arith.constant 0 : i32
    return %arg1, %c0_i32, %c0_i32_0 : i32, i32, i32
  }
  func.func @transform_6(%arg0: i32, %arg1: i32) -> (i32, i32, i32) {
    %c0_i32 = arith.constant 0 : i32
    %c0_i32_0 = arith.constant 0 : i32
    %c0_i32_1 = arith.constant 0 : i32
    return %arg1, %c0_i32, %c0_i32_0 : i32, i32, i32
  }
  func.func @transform_7(%arg0: i32, %arg1: i32) -> (i32, i32, i32) {
    %c0_i32 = arith.constant 0 : i32
    %c0_i32_0 = arith.constant 0 : i32
    %c0_i32_1 = arith.constant 0 : i32
    return %arg1, %c0_i32, %c0_i32_0 : i32, i32, i32
  }
  func.func @transform_8(%arg0: i32, %arg1: i32) -> (i32, i32, i32) {
    %c0_i32 = arith.constant 0 : i32
    %c0_i32_0 = arith.constant 0 : i32
    %c0_i32_1 = arith.constant 0 : i32
    return %arg1, %c0_i32, %c0_i32_0 : i32, i32, i32
  }
  func.func @transform_9(%arg0: i32, %arg1: i32) -> (i32, i32, i32) {
    %c0_i32 = arith.constant 0 : i32
    %c0_i32_0 = arith.constant 0 : i32
    %c0_i32_1 = arith.constant 0 : i32
    return %arg1, %c0_i32, %c0_i32_0 : i32, i32, i32
  }
  func.func @transform_10(%arg0: i32, %arg1: i32) -> (i32, i32, i32) {
    %c0_i32 = arith.constant 0 : i32
    %c0_i32_0 = arith.constant 0 : i32
    %c0_i32_1 = arith.constant 0 : i32
    return %arg1, %c0_i32, %c0_i32_0 : i32, i32, i32
  }
  func.func @transform_11(%arg0: i32, %arg1: i32) -> (i32, i32, i32) {
    %c0_i32 = arith.constant 0 : i32
    %c0_i32_0 = arith.constant 0 : i32
    %c0_i32_1 = arith.constant 0 : i32
    return %arg1, %c0_i32, %c0_i32_0 : i32, i32, i32
  }
  func.func @transform_12(%arg0: i32, %arg1: i32) -> (i32, i32, i32) {
    %c0_i32 = arith.constant 0 : i32
    %c0_i32_0 = arith.constant 0 : i32
    %c0_i32_1 = arith.constant 0 : i32
    return %arg1, %c0_i32, %c0_i32_0 : i32, i32, i32
  }
  func.func @transform_13(%arg0: i32, %arg1: i32) -> (i32, i32, i32) {
    %c0_i32 = arith.constant 0 : i32
    %c0_i32_0 = arith.constant 0 : i32
    %c0_i32_1 = arith.constant 0 : i32
    return %arg1, %c0_i32, %c0_i32_0 : i32, i32, i32
  }
  func.func @transform_14(%arg0: i32, %arg1: i32) -> (i32, i32) {
    %c0_i32 = arith.constant 0 : i32
    %c0_i32_0 = arith.constant 0 : i32
    %c0_i32_1 = arith.constant 0 : i32
    return %c0_i32, %c0_i32_0 : i32, i32
  }
  func.func @transform_15(%arg0: i32, %arg1: i32) -> (i32, i32) {
    %c0_i32 = arith.constant 0 : i32
    %c0_i32_0 = arith.constant 0 : i32
    %c0_i32_1 = arith.constant 0 : i32
    return %c0_i32, %c0_i32_0 : i32, i32
  }
  func.func @transform_16(%arg0: i32, %arg1: i32) -> (i32, i32, i32) {
    %c0_i32 = arith.constant 0 : i32
    %c0_i32_0 = arith.constant 0 : i32
    %c0_i32_1 = arith.constant 0 : i32
    return %arg0, %c0_i32, %c0_i32_0 : i32, i32, i32
  }
}

</mosaic_0001>

<llo_original>
// kernel: encoder_forward.1
$region0: #{encoder_forward.1}
  #allocation0 [shape = 'u32[]', space=smem, size = 0x4, offset = 0x4, fixed_abs, tag = 'smem constant byte address 0x4 - core index']
  #allocation1 [shape = 'u32[144,128]{1,0:T(1,128)}', space=vmem, size = 0x12000, scoped, tag = 'internal scratch']
  #allocation2 [shape = 'f32[8,128]{1,0:T(8,128)}', space=vmem, size = 0x1000, scoped, tag = 'scratch operand']
  %s0 = inlined_call_operand.vmem [shape: f32[2,8,128], index: 0, kind: input, shape index: {}]
  %s1 = inlined_call_operand.vmem [shape: s32[2,1,8], index: 1, kind: input, shape index: {}]
  %s2 = inlined_call_operand.vmem [shape: f32[2,1,128], index: 2, kind: input, shape index: {}]
  %s3 = inlined_call_operand.vmem [shape: f32[2,1,128], index: 3, kind: input, shape index: {}]
  %s4 = inlined_call_operand.hbm [shape: bf16[2,128,384], index: 4, kind: input, shape index: {}]
  %s5 = inlined_call_operand.vmem [shape: f32[2,1,384], index: 5, kind: input, shape index: {}]
  %s6 = inlined_call_operand.vmem [shape: bf16[2,128,128], index: 6, kind: input, shape index: {}]
  %s7 = inlined_call_operand.vmem [shape: f32[2,1,128], index: 7, kind: input, shape index: {}]
  %s8 = inlined_call_operand.vmem [shape: f32[2,1,128], index: 8, kind: input, shape index: {}]
  %s9 = inlined_call_operand.vmem [shape: f32[2,1,128], index: 9, kind: input, shape index: {}]
  %s10 = inlined_call_operand.hbm [shape: bf16[2,128,256], index: 10, kind: input, shape index: {}]
  %s11 = inlined_call_operand.vmem [shape: f32[2,1,256], index: 11, kind: input, shape index: {}]
  %s12 = inlined_call_operand.hbm [shape: bf16[2,256,128], index: 12, kind: input, shape index: {}]
  %s13 = inlined_call_operand.vmem [shape: f32[2,1,128], index: 13, kind: input, shape index: {}]
  %s14 = inlined_call_operand.vmem [shape: f32[1,128], index: 14, kind: input, shape index: {}]
  %s15 = inlined_call_operand.vmem [shape: f32[1,128], index: 15, kind: input, shape index: {}]
  %s16 = inlined_call_operand.hbm [shape: f32[2,8,128], index: 16, kind: output, shape index: {}]
  %s17 = sld [smem:[#allocation0]]
  $region117: #{encoder_forward.1} parent=0
    _
  %s19 = ssub.s32 1, %s17
  %s20 = scalar_select 0, %s19, %s17
  $region1: #{encoder_forward.1} parent=0
    #allocation3 [shape = 'u8[196608]{0}', space=vmem, size = 0x30000, scoped, tag = 'input window, operand 4']
    #allocation4 [shape = 's32[2]{0}', space=sflag, size = 0x8, scoped, tag = 'scoped memory for encoder_forward.1']
    #allocation5 [shape = 's32[2]{0}', space=sflag, size = 0x8, scoped, tag = 'scoped memory for encoder_forward.1']
    #allocation6 [shape = 'u8[131072]{0}', space=vmem, size = 0x20000, scoped, tag = 'input window, operand 10']
    #allocation7 [shape = 's32[2]{0}', space=sflag, size = 0x8, scoped, tag = 'scoped memory for encoder_forward.1']
    #allocation8 [shape = 'u8[131072]{0}', space=vmem, size = 0x20000, scoped, tag = 'input window, operand 12']
    #allocation9 [shape = 'u8[8192]{0}', space=vmem, size = 0x2000, scoped, tag = 'output window, operand 0']
    %21 = vsyncpa [#allocation4], 0
    %s22 = scalar_lea.sflag [#allocation4], 1
    %23 = vsyncpa %s22, 0
    %24 = vsyncpa [#allocation7], 0
    %s25 = scalar_lea.sflag [#allocation7], 1
    %26 = vsyncpa %s25, 0
    %27 = vsyncpa [#allocation5], 0
    %s28 = scalar_lea.sflag [#allocation5], 1
    %29 = vsyncpa %s28, 0
    loop: start=0, step=1, limit=6
    $region2: #{encoder_forward.1} parent=1 // loop_pre_header
      _
    $region3: #{encoder_forward.1} parent=1 // loop_header
      %s31 = sphi 0, %s35
      %p32 = scmp.ge.s32.totalorder %s31, 6
      %s38 = sphi 0, %s50
      %s39 = sphi 0, %s46
      %s40 = sphi 0, %s38
      %s41 = sphi 0, %s39
      %s42 = sphi 0, %s40
      %s43 = sphi 0, %s41
      %s53 = sphi 0, %s55
      %s56 = sphi 0, %s53
      %s57 = sphi 0, %s56
      %s73 = sphi 0, %s57
      %s79 = sphi 0, %s81
      %s82 = sphi 0, %s79
      %s83 = sphi 0, %s82
      %s99 = sphi 0, %s83
      %s105 = sphi 0, %s107
      %s108 = sphi 0, %s105
      %s109 = sphi 0, %s108
      %s125 = sphi 0, %s109
      %s131 = sphi 0, %s133
      %s134 = sphi 0, %s131
      %s135 = sphi 0, %s134
      %s151 = sphi 0, %s135
      %s157 = sphi 0, %s159
      %s160 = sphi 0, %s157
      %s161 = sphi 0, %s160
      %s177 = sphi 0, %s161
      %s183 = sphi 0, %s185
      %s186 = sphi 0, %s183
      %s187 = sphi 0, %s186
      %s203 = sphi 0, %s187
      %s209 = sphi 0, %s211
      %s212 = sphi 0, %s209
      %s213 = sphi 0, %s212
      %s229 = sphi 0, %s213
      %s235 = sphi 0, %s237
      %s238 = sphi 0, %s235
      %s239 = sphi 0, %s238
      %s255 = sphi 0, %s239
      %s261 = sphi 0, %s263
      %s264 = sphi 0, %s261
      %s265 = sphi 0, %s264
      %s281 = sphi 0, %s265
      %s287 = sphi 0, %s289
      %s290 = sphi 0, %s287
      %s291 = sphi 0, %s290
      %s307 = sphi 0, %s291
      %s313 = sphi 0, %s315
      %s316 = sphi 0, %s313
      %s317 = sphi 0, %s316
      %s333 = sphi 0, %s317
      %s339 = sphi 0, %s341
      %s342 = sphi 0, %s339
      %s343 = sphi 0, %s342
      %s359 = sphi 0, %s343
      %s365 = sphi 0, %s367
      %s368 = sphi 0, %s365
      %s369 = sphi 0, %s368
      %s385 = sphi 0, %s369
      %s391 = sphi 0, %s393
      %s394 = sphi 0, %s391
      %s395 = sphi 0, %s394
      %s411 = sphi 0, %s395
      %s415 = sphi 0, %s415
      %s417 = sphi 0, %s415
      %s418 = sphi 0, %s417
      %s432 = sphi 0, %s418
      %s436 = sphi 0, %s436
      %s438 = sphi 0, %s436
      %s439 = sphi 0, %s438
      %s453 = sphi 0, %s439
      %s459 = sphi 0, %s461
      %s462 = sphi 0, %s459
      %s463 = sphi 0, %s462
      %s479 = sphi 0, %s463
    $region4: #{encoder_forward.1} parent=1 // loop_header_branch
      %34 = sbr.rel (%p32) target = $region8
    $region5: #{encoder_forward.1} parent=1 // loop_body
      %s36 = ssub.s32 %s31, 1
      %s37 = ssub.s32 %s31, 2
      %s44 = sadd.s32 1, %s39
      %p45 = scmp.ge.s32.totalorder %s44, 2
      %s46 = scalar_select %p45, 0, %s44
      %s47 = sadd.s32 1, %s38
      %s48 = scalar_select %p45, %s47, %s38
      %p49 = scmp.ge.s32.totalorder %s48, 2
      %s50 = scalar_select %p49, 0, %s48
      %s51 = ssub.s32 %s38, %s50
      %p52 = scmp.eq.s32.totalorder %s51, 0
      %s54 = sadd.s32 %s53, 1
      %s55 = scalar_select %p52, %s53, %s54
      %p58 = pneg %p52
      %p59 = scmp.eq.s32.totalorder %s31, 3
      %p60 = por %p58, %p59
      %p61 = scmp.ne.s32.totalorder %s53, %s56
      %p62 = scmp.eq.s32.totalorder %s31, 0
      %p63 = por %p61, %p62
      %p64 = scmp.ne.s32.totalorder %s53, %s56
      %p65 = scmp.eq.s32.totalorder %s36, 3
      %p66 = por %p64, %p65
      %p67 = scmp.ne.s32.totalorder %s56, %s57
      %p68 = scmp.eq.s32.totalorder %s36, 0
      %p69 = por %p67, %p68
      %p70 = scmp.ne.s32.totalorder %s56, %s57
      %p71 = scmp.eq.s32.totalorder %s37, 3
      %p72 = por %p70, %p71
      %p74 = scmp.ne.s32.totalorder %s57, %s73
      %p75 = scmp.eq.s32.totalorder %s37, 0
      %p76 = por %p74, %p75
      %s77 = ssub.s32 %s38, %s50
      %p78 = scmp.eq.s32.totalorder %s77, 0
      %s80 = sadd.s32 %s79, 1
      %s81 = scalar_select %p78, %s79, %s80
      %p84 = pneg %p78
      %p85 = scmp.eq.s32.totalorder %s31, 3
      %p86 = por %p84, %p85
      %p87 = scmp.ne.s32.totalorder %s79, %s82
      %p88 = scmp.eq.s32.totalorder %s31, 0
      %p89 = por %p87, %p88
      %p90 = scmp.ne.s32.totalorder %s79, %s82
      %p91 = scmp.eq.s32.totalorder %s36, 3
      %p92 = por %p90, %p91
      %p93 = scmp.ne.s32.totalorder %s82, %s83
      %p94 = scmp.eq.s32.totalorder %s36, 0
      %p95 = por %p93, %p94
      %p96 = scmp.ne.s32.totalorder %s82, %s83
      %p97 = scmp.eq.s32.totalorder %s37, 3
      %p98 = por %p96, %p97
      %p100 = scmp.ne.s32.totalorder %s83, %s99
      %p101 = scmp.eq.s32.totalorder %s37, 0
      %p102 = por %p100, %p101
      %s103 = ssub.s32 %s39, %s46
      %p104 = scmp.eq.s32.totalorder %s103, 0
      %s106 = sadd.s32 %s105, 1
      %s107 = scalar_select %p104, %s105, %s106
      %p110 = pneg %p104
      %p111 = scmp.eq.s32.totalorder %s31, 3
      %p112 = por %p110, %p111
      %p113 = scmp.ne.s32.totalorder %s105, %s108
      %p114 = scmp.eq.s32.totalorder %s31, 0
      %p115 = por %p113, %p114
      %p116 = scmp.ne.s32.totalorder %s105, %s108
      %p117 = scmp.eq.s32.totalorder %s36, 3
      %p118 = por %p116, %p117
      %p119 = scmp.ne.s32.totalorder %s108, %s109
      %p120 = scmp.eq.s32.totalorder %s36, 0
      %p121 = por %p119, %p120
      %p122 = scmp.ne.s32.totalorder %s108, %s109
      %p123 = scmp.eq.s32.totalorder %s37, 3
      %p124 = por %p122, %p123
      %p126 = scmp.ne.s32.totalorder %s109, %s125
      %p127 = scmp.eq.s32.totalorder %s37, 0
      %p128 = por %p126, %p127
      %s129 = ssub.s32 %s39, %s46
      %p130 = scmp.eq.s32.totalorder %s129, 0
      %s132 = sadd.s32 %s131, 1
      %s133 = scalar_select %p130, %s131, %s132
      %p136 = pneg %p130
      %p137 = scmp.eq.s32.totalorder %s31, 3
      %p138 = por %p136, %p137
      %p139 = scmp.ne.s32.totalorder %s131, %s134
      %p140 = scmp.eq.s32.totalorder %s31, 0
      %p141 = por %p139, %p140
      %p142 = scmp.ne.s32.totalorder %s131, %s134
      %p143 = scmp.eq.s32.totalorder %s36, 3
      %p144 = por %p142, %p143
      %p145 = scmp.ne.s32.totalorder %s134, %s135
      %p146 = scmp.eq.s32.totalorder %s36, 0
      %p147 = por %p145, %p146
      %p148 = scmp.ne.s32.totalorder %s134, %s135
      %p149 = scmp.eq.s32.totalorder %s37, 3
      %p150 = por %p148, %p149
      %p152 = scmp.ne.s32.totalorder %s135, %s151
      %p153 = scmp.eq.s32.totalorder %s37, 0
      %p154 = por %p152, %p153
      %s155 = ssub.s32 %s39, %s46
      %p156 = scmp.eq.s32.totalorder %s155, 0
      %s158 = sadd.s32 %s157, 1
      %s159 = scalar_select %p156, %s157, %s158
      %p162 = pneg %p156
      %p163 = scmp.eq.s32.totalorder %s31, 3
      %p164 = por %p162, %p163
      %p165 = scmp.ne.s32.totalorder %s157, %s160
      %p166 = scmp.eq.s32.totalorder %s31, 0
      %p167 = por %p165, %p166
      %p168 = scmp.ne.s32.totalorder %s157, %s160
      %p169 = scmp.eq.s32.totalorder %s36, 3
      %p170 = por %p168, %p169
      %p171 = scmp.ne.s32.totalorder %s160, %s161
      %p172 = scmp.eq.s32.totalorder %s36, 0
      %p173 = por %p171, %p172
      %p174 = scmp.ne.s32.totalorder %s160, %s161
      %p175 = scmp.eq.s32.totalorder %s37, 3
      %p176 = por %p174, %p175
      %p178 = scmp.ne.s32.totalorder %s161, %s177
      %p179 = scmp.eq.s32.totalorder %s37, 0
      %p180 = por %p178, %p179
      %s181 = ssub.s32 %s39, %s46
      %p182 = scmp.eq.s32.totalorder %s181, 0
      %s184 = sadd.s32 %s183, 1
      %s185 = scalar_select %p182, %s183, %s184
      %p188 = pneg %p182
      %p189 = scmp.eq.s32.totalorder %s31, 3
      %p190 = por %p188, %p189
      %p191 = scmp.ne.s32.totalorder %s183, %s186
      %p192 = scmp.eq.s32.totalorder %s31, 0
      %p193 = por %p191, %p192
      %p194 = scmp.ne.s32.totalorder %s183, %s186
      %p195 = scmp.eq.s32.totalorder %s36, 3
      %p196 = por %p194, %p195
      %p197 = scmp.ne.s32.totalorder %s186, %s187
      %p198 = scmp.eq.s32.totalorder %s36, 0
      %p199 = por %p197, %p198
      %p200 = scmp.ne.s32.totalorder %s186, %s187
      %p201 = scmp.eq.s32.totalorder %s37, 3
      %p202 = por %p200, %p201
      %p204 = scmp.ne.s32.totalorder %s187, %s203
      %p205 = scmp.eq.s32.totalorder %s37, 0
      %p206 = por %p204, %p205
      %s207 = ssub.s32 %s39, %s46
      %p208 = scmp.eq.s32.totalorder %s207, 0
      %s210 = sadd.s32 %s209, 1
      %s211 = scalar_select %p208, %s209, %s210
      %p214 = pneg %p208
      %p215 = scmp.eq.s32.totalorder %s31, 3
      %p216 = por %p214, %p215
      %p217 = scmp.ne.s32.totalorder %s209, %s212
      %p218 = scmp.eq.s32.totalorder %s31, 0
      %p219 = por %p217, %p218
      %p220 = scmp.ne.s32.totalorder %s209, %s212
      %p221 = scmp.eq.s32.totalorder %s36, 3
      %p222 = por %p220, %p221
      %p223 = scmp.ne.s32.totalorder %s212, %s213
      %p224 = scmp.eq.s32.totalorder %s36, 0
      %p225 = por %p223, %p224
      %p226 = scmp.ne.s32.totalorder %s212, %s213
      %p227 = scmp.eq.s32.totalorder %s37, 3
      %p228 = por %p226, %p227
      %p230 = scmp.ne.s32.totalorder %s213, %s229
      %p231 = scmp.eq.s32.totalorder %s37, 0
      %p232 = por %p230, %p231
      %s233 = ssub.s32 %s39, %s46
      %p234 = scmp.eq.s32.totalorder %s233, 0
      %s236 = sadd.s32 %s235, 1
      %s237 = scalar_select %p234, %s235, %s236
      %p240 = pneg %p234
      %p241 = scmp.eq.s32.totalorder %s31, 3
      %p242 = por %p240, %p241
      %p243 = scmp.ne.s32.totalorder %s235, %s238
      %p244 = scmp.eq.s32.totalorder %s31, 0
      %p245 = por %p243, %p244
      %p246 = scmp.ne.s32.totalorder %s235, %s238
      %p247 = scmp.eq.s32.totalorder %s36, 3
      %p248 = por %p246, %p247
      %p249 = scmp.ne.s32.totalorder %s238, %s239
      %p250 = scmp.eq.s32.totalorder %s36, 0
      %p251 = por %p249, %p250
      %p252 = scmp.ne.s32.totalorder %s238, %s239
      %p253 = scmp.eq.s32.totalorder %s37, 3
      %p254 = por %p252, %p253
      %p256 = scmp.ne.s32.totalorder %s239, %s255
      %p257 = scmp.eq.s32.totalorder %s37, 0
      %p258 = por %p256, %p257
      %s259 = ssub.s32 %s39, %s46
      %p260 = scmp.eq.s32.totalorder %s259, 0
      %s262 = sadd.s32 %s261, 1
      %s263 = scalar_select %p260, %s261, %s262
      %p266 = pneg %p260
      %p267 = scmp.eq.s32.totalorder %s31, 3
      %p268 = por %p266, %p267
      %p269 = scmp.ne.s32.totalorder %s261, %s264
      %p270 = scmp.eq.s32.totalorder %s31, 0
      %p271 = por %p269, %p270
      %p272 = scmp.ne.s32.totalorder %s261, %s264
      %p273 = scmp.eq.s32.totalorder %s36, 3
      %p274 = por %p272, %p273
      %p275 = scmp.ne.s32.totalorder %s264, %s265
      %p276 = scmp.eq.s32.totalorder %s36, 0
      %p277 = por %p275, %p276
      %p278 = scmp.ne.s32.totalorder %s264, %s265
      %p279 = scmp.eq.s32.totalorder %s37, 3
      %p280 = por %p278, %p279
      %p282 = scmp.ne.s32.totalorder %s265, %s281
      %p283 = scmp.eq.s32.totalorder %s37, 0
      %p284 = por %p282, %p283
      %s285 = ssub.s32 %s39, %s46
      %p286 = scmp.eq.s32.totalorder %s285, 0
      %s288 = sadd.s32 %s287, 1
      %s289 = scalar_select %p286, %s287, %s288
      %p292 = pneg %p286
      %p293 = scmp.eq.s32.totalorder %s31, 3
      %p294 = por %p292, %p293
      %p295 = scmp.ne.s32.totalorder %s287, %s290
      %p296 = scmp.eq.s32.totalorder %s31, 0
      %p297 = por %p295, %p296
      %p298 = scmp.ne.s32.totalorder %s287, %s290
      %p299 = scmp.eq.s32.totalorder %s36, 3
      %p300 = por %p298, %p299
      %p301 = scmp.ne.s32.totalorder %s290, %s291
      %p302 = scmp.eq.s32.totalorder %s36, 0
      %p303 = por %p301, %p302
      %p304 = scmp.ne.s32.totalorder %s290, %s291
      %p305 = scmp.eq.s32.totalorder %s37, 3
      %p306 = por %p304, %p305
      %p308 = scmp.ne.s32.totalorder %s291, %s307
      %p309 = scmp.eq.s32.totalorder %s37, 0
      %p310 = por %p308, %p309
      %s311 = ssub.s32 %s39, %s46
      %p312 = scmp.eq.s32.totalorder %s311, 0
      %s314 = sadd.s32 %s313, 1
      %s315 = scalar_select %p312, %s313, %s314
      %p318 = pneg %p312
      %p319 = scmp.eq.s32.totalorder %s31, 3
      %p320 = por %p318, %p319
      %p321 = scmp.ne.s32.totalorder %s313, %s316
      %p322 = scmp.eq.s32.totalorder %s31, 0
      %p323 = por %p321, %p322
      %p324 = scmp.ne.s32.totalorder %s313, %s316
      %p325 = scmp.eq.s32.totalorder %s36, 3
      %p326 = por %p324, %p325
      %p327 = scmp.ne.s32.totalorder %s316, %s317
      %p328 = scmp.eq.s32.totalorder %s36, 0
      %p329 = por %p327, %p328
      %p330 = scmp.ne.s32.totalorder %s316, %s317
      %p331 = scmp.eq.s32.totalorder %s37, 3
      %p332 = por %p330, %p331
      %p334 = scmp.ne.s32.totalorder %s317, %s333
      %p335 = scmp.eq.s32.totalorder %s37, 0
      %p336 = por %p334, %p335
      %s337 = ssub.s32 %s39, %s46
      %p338 = scmp.eq.s32.totalorder %s337, 0
      %s340 = sadd.s32 %s339, 1
      %s341 = scalar_select %p338, %s339, %s340
      %p344 = pneg %p338
      %p345 = scmp.eq.s32.totalorder %s31, 3
      %p346 = por %p344, %p345
      %p347 = scmp.ne.s32.totalorder %s339, %s342
      %p348 = scmp.eq.s32.totalorder %s31, 0
      %p349 = por %p347, %p348
      %p350 = scmp.ne.s32.totalorder %s339, %s342
      %p351 = scmp.eq.s32.totalorder %s36, 3
      %p352 = por %p350, %p351
      %p353 = scmp.ne.s32.totalorder %s342, %s343
      %p354 = scmp.eq.s32.totalorder %s36, 0
      %p355 = por %p353, %p354
      %p356 = scmp.ne.s32.totalorder %s342, %s343
      %p357 = scmp.eq.s32.totalorder %s37, 3
      %p358 = por %p356, %p357
      %p360 = scmp.ne.s32.totalorder %s343, %s359
      %p361 = scmp.eq.s32.totalorder %s37, 0
      %p362 = por %p360, %p361
      %s363 = ssub.s32 %s39, %s46
      %p364 = scmp.eq.s32.totalorder %s363, 0
      %s366 = sadd.s32 %s365, 1
      %s367 = scalar_select %p364, %s365, %s366
      %p370 = pneg %p364
      %p371 = scmp.eq.s32.totalorder %s31, 3
      %p372 = por %p370, %p371
      %p373 = scmp.ne.s32.totalorder %s365, %s368
      %p374 = scmp.eq.s32.totalorder %s31, 0
      %p375 = por %p373, %p374
      %p376 = scmp.ne.s32.totalorder %s365, %s368
      %p377 = scmp.eq.s32.totalorder %s36, 3
      %p378 = por %p376, %p377
      %p379 = scmp.ne.s32.totalorder %s368, %s369
      %p380 = scmp.eq.s32.totalorder %s36, 0
      %p381 = por %p379, %p380
      %p382 = scmp.ne.s32.totalorder %s368, %s369
      %p383 = scmp.eq.s32.totalorder %s37, 3
      %p384 = por %p382, %p383
      %p386 = scmp.ne.s32.totalorder %s369, %s385
      %p387 = scmp.eq.s32.totalorder %s37, 0
      %p388 = por %p386, %p387
      %s389 = ssub.s32 %s39, %s46
      %p390 = scmp.eq.s32.totalorder %s389, 0
      %s392 = sadd.s32 %s391, 1
      %s393 = scalar_select %p390, %s391, %s392
      %p396 = pneg %p390
      %p397 = scmp.eq.s32.totalorder %s31, 3
      %p398 = por %p396, %p397
      %p399 = scmp.ne.s32.totalorder %s391, %s394
      %p400 = scmp.eq.s32.totalorder %s31, 0
      %p401 = por %p399, %p400
      %p402 = scmp.ne.s32.totalorder %s391, %s394
      %p403 = scmp.eq.s32.totalorder %s36, 3
      %p404 = por %p402, %p403
      %p405 = scmp.ne.s32.totalorder %s394, %s395
      %p406 = scmp.eq.s32.totalorder %s36, 0
      %p407 = por %p405, %p406
      %p408 = scmp.ne.s32.totalorder %s394, %s395
      %p409 = scmp.eq.s32.totalorder %s37, 3
      %p410 = por %p408, %p409
      %p412 = scmp.ne.s32.totalorder %s395, %s411
      %p413 = scmp.eq.s32.totalorder %s37, 0
      %p414 = por %p412, %p413
      %s416 = sadd.s32 %s415, 1
      %p419 = scmp.eq.s32.totalorder %s31, 3
      %p420 = scmp.ne.s32.totalorder %s415, %s417
      %p421 = scmp.eq.s32.totalorder %s31, 0
      %p422 = por %p420, %p421
      %p423 = scmp.ne.s32.totalorder %s415, %s417
      %p424 = scmp.eq.s32.totalorder %s36, 3
      %p425 = por %p423, %p424
      %p426 = scmp.ne.s32.totalorder %s417, %s418
      %p427 = scmp.eq.s32.totalorder %s36, 0
      %p428 = por %p426, %p427
      %p429 = scmp.ne.s32.totalorder %s417, %s418
      %p430 = scmp.eq.s32.totalorder %s37, 3
      %p431 = por %p429, %p430
      %p433 = scmp.ne.s32.totalorder %s418, %s432
      %p434 = scmp.eq.s32.totalorder %s37, 0
      %p435 = por %p433, %p434
      %s437 = sadd.s32 %s436, 1
      %p440 = scmp.eq.s32.totalorder %s31, 3
      %p441 = scmp.ne.s32.totalorder %s436, %s438
      %p442 = scmp.eq.s32.totalorder %s31, 0
      %p443 = por %p441, %p442
      %p444 = scmp.ne.s32.totalorder %s436, %s438
      %p445 = scmp.eq.s32.totalorder %s36, 3
      %p446 = por %p444, %p445
      %p447 = scmp.ne.s32.totalorder %s438, %s439
      %p448 = scmp.eq.s32.totalorder %s36, 0
      %p449 = por %p447, %p448
      %p450 = scmp.ne.s32.totalorder %s438, %s439
      %p451 = scmp.eq.s32.totalorder %s37, 3
      %p452 = por %p450, %p451
      %p454 = scmp.ne.s32.totalorder %s439, %s453
      %p455 = scmp.eq.s32.totalorder %s37, 0
      %p456 = por %p454, %p455
      %s457 = ssub.s32 %s38, %s50
      %p458 = scmp.eq.s32.totalorder %s457, 0
      %s460 = sadd.s32 %s459, 1
      %s461 = scalar_select %p458, %s459, %s460
      %p464 = pneg %p458
      %p465 = scmp.eq.s32.totalorder %s31, 3
      %p466 = por %p464, %p465
      %p467 = scmp.ne.s32.totalorder %s459, %s462
      %p468 = scmp.eq.s32.totalorder %s31, 0
      %p469 = por %p467, %p468
      %p470 = scmp.ne.s32.totalorder %s459, %s462
      %p471 = scmp.eq.s32.totalorder %s36, 3
      %p472 = por %p470, %p471
      %p473 = scmp.ne.s32.totalorder %s462, %s463
      %p474 = scmp.eq.s32.totalorder %s36, 0
      %p475 = por %p473, %p474
      %p476 = scmp.ne.s32.totalorder %s462, %s463
      %p477 = scmp.eq.s32.totalorder %s37, 3
      %p478 = por %p476, %p477
      %p480 = scmp.ne.s32.totalorder %s463, %s479
      %p481 = scmp.eq.s32.totalorder %s37, 0
      %p482 = por %p480, %p481
      %p483 = scmp.le.s32.totalorder 1, %s31
      %p484 = scmp.lt.s32.totalorder %s31, 5
      %p485 = pnand %p483, %p484
      %p486 = pneg %p485
      // Predicated region
      $region9: #{encoder_forward.1} parent=5 // pred_check
        _
      $region10: #{encoder_forward.1} parent=5 // pred_check_branch
        %488 = sbr.rel (%p485) target = $region12
      $region11: #{encoder_forward.1} parent=5 // pred_region
        %s489 = ssub.s32 %s31, 1
        // Predicated region
        $region13: #{encoder_forward.1} parent=11 // pred_check
          %p490 = pneg %p428
        $region14: #{encoder_forward.1} parent=11 // pred_check_branch
          %492 = sbr.rel (%p490) target = $region16
        $region15: #{encoder_forward.1} parent=11 // pred_region
          _
        $region16: #{encoder_forward.1} parent=11 // pred_fallthru
          _
        // Predicated region
        $region17: #{encoder_forward.1} parent=11 // pred_check
          %p493 = pneg %p449
        $region18: #{encoder_forward.1} parent=11 // pred_check_branch
          %495 = sbr.rel (%p493) target = $region20
        $region19: #{encoder_forward.1} parent=11 // pred_region
          _
        $region20: #{encoder_forward.1} parent=11 // pred_fallthru
          _
      $region12: #{encoder_forward.1} parent=5 // pred_fallthru
        _
      %p496 = scmp.lt.s32.totalorder %s31, 4
      // Predicated region
      $region21: #{encoder_forward.1} parent=5 // pred_check
        %p497 = pneg %p496
      $region22: #{encoder_forward.1} parent=5 // pred_check_branch
        %499 = sbr.rel (%p497) target = $region24
      $region23: #{encoder_forward.1} parent=5 // pred_region
        // Predicated region
        $region25: #{encoder_forward.1} parent=23 // pred_check
          %p500 = pneg %p63
        $region26: #{encoder_forward.1} parent=23 // pred_check_branch
          %502 = sbr.rel (%p500) target = $region28
        $region27: #{encoder_forward.1} parent=23 // pred_region
          %p503 = scmp.lt.s32.totalorder %s38, 1
          %s504 = scalar_select %p503, %s38, 1
          %s505 = smul.addr %s504, 8
          %s506 = scalar_lea.vmem %s0, %s505
        $region28: #{encoder_forward.1} parent=23 // pred_fallthru
          _
        // Predicated region
        $region29: #{encoder_forward.1} parent=23 // pred_check
          %p507 = pneg %p89
        $region30: #{encoder_forward.1} parent=23 // pred_check_branch
          %509 = sbr.rel (%p507) target = $region32
        $region31: #{encoder_forward.1} parent=23 // pred_region
          %p510 = scmp.lt.s32.totalorder %s38, 1
          %s511 = scalar_select %p510, %s38, 1
          %s512 = scalar_lea.vmem %s1, %s511
        $region32: #{encoder_forward.1} parent=23 // pred_fallthru
          _
        // Predicated region
        $region33: #{encoder_forward.1} parent=23 // pred_check
          %p513 = pneg %p115
        $region34: #{encoder_forward.1} parent=23 // pred_check_branch
          %515 = sbr.rel (%p513) target = $region36
        $region35: #{encoder_forward.1} parent=23 // pred_region
          %p516 = scmp.lt.s32.totalorder %s39, 1
          %s517 = scalar_select %p516, %s39, 1
          %s518 = scalar_lea.vmem %s2, %s517
        $region36: #{encoder_forward.1} parent=23 // pred_fallthru
          _
        // Predicated region
        $region37: #{encoder_forward.1} parent=23 // pred_check
          %p519 = pneg %p141
        $region38: #{encoder_forward.1} parent=23 // pred_check_branch
          %521 = sbr.rel (%p519) target = $region40
        $region39: #{encoder_forward.1} parent=23 // pred_region
          %p522 = scmp.lt.s32.totalorder %s39, 1
          %s523 = scalar_select %p522, %s39, 1
          %s524 = scalar_lea.vmem %s3, %s523
        $region40: #{encoder_forward.1} parent=23 // pred_fallthru
          _
        // Predicated region
        $region41: #{encoder_forward.1} parent=23 // pred_check
          %p525 = pneg %p167
        $region42: #{encoder_forward.1} parent=23 // pred_check_branch
          %527 = sbr.rel (%p525) target = $region44
        $region43: #{encoder_forward.1} parent=23 // pred_region
          %s528 = sand.u32 %s157, 1
          %s529 = scalar_lea.sflag [#allocation4], %s528
          %s530 = sand.u32 %s157, 1
          %s531 = smul.addr %s530, 192
          %s532 = scalar_lea.vmem [#allocation3], %s531
          %s534 = ssub.s32 3072, 3072
          %535 = vsyncadd %s529, %s534
          %s536 = smul.addr %s39, 48
          %s537 = smul.addr %s536, 64
          %s538 = scalar_lea.hbm %s4, %s537
          %s539 = sshll.u32 %s532, 4
          %s540 = int_to_ptr.vmem [resolvable:$true] %s539
          %545 = dma.hbm_to_vmem [thread:$0]  %s538, 3072, %s540, %s529, 192, 192, 12
        $region44: #{encoder_forward.1} parent=23 // pred_fallthru
          _
        // Predicated region
        $region45: #{encoder_forward.1} parent=23 // pred_check
          %p546 = pneg %p193
        $region46: #{encoder_forward.1} parent=23 // pred_check_branch
          %548 = sbr.rel (%p546) target = $region48
        $region47: #{encoder_forward.1} parent=23 // pred_region
          %p549 = scmp.lt.s32.totalorder %s39, 1
          %s550 = scalar_select %p549, %s39, 1
          %s551 = smul.addr %s550, 3
          %s552 = scalar_lea.vmem %s5, %s551
        $region48: #{encoder_forward.1} parent=23 // pred_fallthru
          _
        // Predicated region
        $region49: #{encoder_forward.1} parent=23 // pred_check
          %p553 = pneg %p219
        $region50: #{encoder_forward.1} parent=23 // pred_check_branch
          %555 = sbr.rel (%p553) target = $region52
        $region51: #{encoder_forward.1} parent=23 // pred_region
          %p556 = scmp.lt.s32.totalorder %s39, 1
          %s557 = scalar_select %p556, %s39, 1
          %s558 = smul.addr %s557, 16
          %s559 = smul.addr %s558, 4
          %s560 = scalar_lea.vmem %s6, %s559
        $region52: #{encoder_forward.1} parent=23 // pred_fallthru
          _
        // Predicated region
        $region53: #{encoder_forward.1} parent=23 // pred_check
          %p561 = pneg %p245
        $region54: #{encoder_forward.1} parent=23 // pred_check_branch
          %563 = sbr.rel (%p561) target = $region56
        $region55: #{encoder_forward.1} parent=23 // pred_region
          %p564 = scmp.lt.s32.totalorder %s39, 1
          %s565 = scalar_select %p564, %s39, 1
          %s566 = scalar_lea.vmem %s7, %s565
        $region56: #{encoder_forward.1} parent=23 // pred_fallthru
          _
        // Predicated region
        $region57: #{encoder_forward.1} parent=23 // pred_check
          %p567 = pneg %p271
        $region58: #{encoder_forward.1} parent=23 // pred_check_branch
          %569 = sbr.rel (%p567) target = $region60
        $region59: #{encoder_forward.1} parent=23 // pred_region
          %p570 = scmp.lt.s32.totalorder %s39, 1
          %s571 = scalar_select %p570, %s39, 1
          %s572 = scalar_lea.vmem %s8, %s571
        $region60: #{encoder_forward.1} parent=23 // pred_fallthru
          _
        // Predicated region
        $region61: #{encoder_forward.1} parent=23 // pred_check
          %p573 = pneg %p297
        $region62: #{encoder_forward.1} parent=23 // pred_check_branch
          %575 = sbr.rel (%p573) target = $region64
        $region63: #{encoder_forward.1} parent=23 // pred_region
          %p576 = scmp.lt.s32.totalorder %s39, 1
          %s577 = scalar_select %p576, %s39, 1
          %s578 = scalar_lea.vmem %s9, %s577
        $region64: #{encoder_forward.1} parent=23 // pred_fallthru
          _
        // Predicated region
        $region65: #{encoder_forward.1} parent=23 // pred_check
          %p579 = pneg %p323
        $region66: #{encoder_forward.1} parent=23 // pred_check_branch
          %581 = sbr.rel (%p579) target = $region68
        $region67: #{encoder_forward.1} parent=23 // pred_region
          %s582 = sand.u32 %s31, 1
          %s583 = scalar_lea.sflag [#allocation7], %s582
          %s584 = sand.u32 %s313, 1
          %s585 = smul.addr %s584, 128
          %s586 = scalar_lea.vmem [#allocation6], %s585
          %s588 = ssub.s32 2048, 2048
          %589 = vsyncadd %s583, %s588
          %s590 = smul.addr %s39, 32
          %s591 = smul.addr %s590, 64
          %s592 = scalar_lea.hbm %s10, %s591
          %s593 = sshll.u32 %s586, 4
          %s594 = int_to_ptr.vmem [resolvable:$true] %s593
          %599 = dma.hbm_to_vmem [thread:$0]  %s592, 2048, %s594, %s583, 128, 128, 8
        $region68: #{encoder_forward.1} parent=23 // pred_fallthru
          _
        // Predicated region
        $region69: #{encoder_forward.1} parent=23 // pred_check
          %p600 = pneg %p349
        $region70: #{encoder_forward.1} parent=23 // pred_check_branch
          %602 = sbr.rel (%p600) target = $region72
        $region71: #{encoder_forward.1} parent=23 // pred_region
          %p603 = scmp.lt.s32.totalorder %s39, 1
          %s604 = scalar_select %p603, %s39, 1
          %s605 = smul.addr %s604, 2
          %s606 = scalar_lea.vmem %s11, %s605
        $region72: #{encoder_forward.1} parent=23 // pred_fallthru
          _
        // Predicated region
        $region73: #{encoder_forward.1} parent=23 // pred_check
          %p607 = pneg %p375
        $region74: #{encoder_forward.1} parent=23 // pred_check_branch
          %609 = sbr.rel (%p607) target = $region76
        $region75: #{encoder_forward.1} parent=23 // pred_region
          %s610 = sand.u32 %s31, 1
          %s611 = scalar_lea.sflag [#allocation7], %s610
          %s612 = sand.u32 %s365, 1
          %s613 = smul.addr %s612, 128
          %s614 = scalar_lea.vmem [#allocation8], %s613
          %s616 = ssub.s32 2048, 2048
          %617 = vsyncadd %s611, %s616
          %s618 = smul.addr %s39, 32
          %s619 = smul.addr %s618, 64
          %s620 = scalar_lea.hbm %s12, %s619
          %s621 = sshll.u32 %s614, 4
          %s622 = int_to_ptr.vmem [resolvable:$true] %s621
          %627 = dma.hbm_to_vmem [thread:$0]  %s620, 2048, %s622, %s611, 64, 64, 4
        $region76: #{encoder_forward.1} parent=23 // pred_fallthru
          _
        // Predicated region
        $region77: #{encoder_forward.1} parent=23 // pred_check
          %p628 = pneg %p401
        $region78: #{encoder_forward.1} parent=23 // pred_check_branch
          %630 = sbr.rel (%p628) target = $region80
        $region79: #{encoder_forward.1} parent=23 // pred_region
          %p631 = scmp.lt.s32.totalorder %s39, 1
          %s632 = scalar_select %p631, %s39, 1
          %s633 = scalar_lea.vmem %s13, %s632
        $region80: #{encoder_forward.1} parent=23 // pred_fallthru
          _
      $region24: #{encoder_forward.1} parent=5 // pred_fallthru
        _
      %p634 = scmp.le.s32.totalorder 1, %s31
      %p635 = scmp.lt.s32.totalorder %s31, 5
      %p636 = pnand %p634, %p635
      %p637 = pneg %p636
      // Predicated region
      $region81: #{encoder_forward.1} parent=5 // pred_check
        _
      $region82: #{encoder_forward.1} parent=5 // pred_check_branch
        %639 = sbr.rel (%p636) target = $region84
      $region83: #{encoder_forward.1} parent=5 // pred_region
        %s640 = ssub.s32 %s31, 1
        %s641 = sand.u32 %s160, 1
        %s642 = scalar_lea.sflag [#allocation4], %s641
        %s643 = sand.u32 %s160, 1
        %s644 = smul.addr %s643, 192
        %s645 = scalar_lea.vmem [#allocation3], %s644
        // Predicated region
        $region85: #{encoder_forward.1} parent=83 // pred_check
          %p646 = pneg %p173
        $region86: #{encoder_forward.1} parent=83 // pred_check_branch
          %648 = sbr.rel (%p646) target = $region88
        $region87: #{encoder_forward.1} parent=83 // pred_region
          %649 = dma.done %s642, 3072
        $region88: #{encoder_forward.1} parent=83 // pred_fallthru
          _
        %s650 = sand.u32 %s36, 1
        %s651 = scalar_lea.sflag [#allocation7], %s650
        %s652 = sand.u32 %s316, 1
        %s653 = smul.addr %s652, 128
        %s654 = scalar_lea.vmem [#allocation6], %s653
        // Predicated region
        $region89: #{encoder_forward.1} parent=83 // pred_check
          %p655 = pneg %p329
        $region90: #{encoder_forward.1} parent=83 // pred_check_branch
          %657 = sbr.rel (%p655) target = $region92
        $region91: #{encoder_forward.1} parent=83 // pred_region
          %658 = dma.done %s651, 2048
        $region92: #{encoder_forward.1} parent=83 // pred_fallthru
          _
        %s659 = sand.u32 %s36, 1
        %s660 = scalar_lea.sflag [#allocation7], %s659
        %s661 = sand.u32 %s368, 1
        %s662 = smul.addr %s661, 128
        %s663 = scalar_lea.vmem [#allocation8], %s662
        // Predicated region
        $region93: #{encoder_forward.1} parent=83 // pred_check
          %p664 = pneg %p381
        $region94: #{encoder_forward.1} parent=83 // pred_check_branch
          %666 = sbr.rel (%p664) target = $region96
        $region95: #{encoder_forward.1} parent=83 // pred_region
          %667 = dma.done %s660, 2048
        $region96: #{encoder_forward.1} parent=83 // pred_fallthru
          _
        %p668 = scmp.lt.s32.totalorder %s40, 1
        %s669 = scalar_select %p668, %s40, 1
        %s670 = smul.addr %s669, 8
        %s671 = scalar_lea.vmem %s0, %s670
        %p672 = pneg %p69
        %p673 = pneg %p66
        %p674 = scmp.lt.s32.totalorder %s40, 1
        %s675 = scalar_select %p674, %s40, 1
        %s676 = scalar_lea.vmem %s1, %s675
        %p677 = pneg %p95
        %p678 = pneg %p92
        %p679 = scmp.lt.s32.totalorder %s41, 1
        %s680 = scalar_select %p679, %s41, 1
        %s681 = scalar_lea.vmem %s2, %s680
        %p682 = pneg %p121
        %p683 = pneg %p118
        %p684 = scmp.lt.s32.totalorder %s41, 1
        %s685 = scalar_select %p684, %s41, 1
        %s686 = scalar_lea.vmem %s3, %s685
        %p687 = pneg %p147
        %p688 = pneg %p144
        %s689 = sand.u32 %s160, 1
        %s690 = scalar_lea.sflag [#allocation4], %s689
        %s691 = sand.u32 %s160, 1
        %s692 = smul.addr %s691, 192
        %s693 = scalar_lea.vmem [#allocation3], %s692
        %p694 = pneg %p173
        %p695 = pneg %p170
        %p696 = scmp.lt.s32.totalorder %s41, 1
        %s697 = scalar_select %p696, %s41, 1
        %s698 = smul.addr %s697, 3
        %s699 = scalar_lea.vmem %s5, %s698
        %p700 = pneg %p199
        %p701 = pneg %p196
        %p702 = scmp.lt.s32.totalorder %s41, 1
        %s703 = scalar_select %p702, %s41, 1
        %s704 = smul.addr %s703, 16
        %s705 = smul.addr %s704, 4
        %s706 = scalar_lea.vmem %s6, %s705
        %p707 = pneg %p225
        %p708 = pneg %p222
        %p709 = scmp.lt.s32.totalorder %s41, 1
        %s710 = scalar_select %p709, %s41, 1
        %s711 = scalar_lea.vmem %s7, %s710
        %p712 = pneg %p251
        %p713 = pneg %p248
        %p714 = scmp.lt.s32.totalorder %s41, 1
        %s715 = scalar_select %p714, %s41, 1
        %s716 = scalar_lea.vmem %s8, %s715
        %p717 = pneg %p277
        %p718 = pneg %p274
        %p719 = scmp.lt.s32.totalorder %s41, 1
        %s720 = scalar_select %p719, %s41, 1
        %s721 = scalar_lea.vmem %s9, %s720
        %p722 = pneg %p303
        %p723 = pneg %p300
        %s724 = sand.u32 %s36, 1
        %s725 = scalar_lea.sflag [#allocation7], %s724
        %s726 = sand.u32 %s316, 1
        %s727 = smul.addr %s726, 128
        %s728 = scalar_lea.vmem [#allocation6], %s727
        %p729 = pneg %p329
        %p730 = pneg %p326
        %p731 = scmp.lt.s32.totalorder %s41, 1
        %s732 = scalar_select %p731, %s41, 1
        %s733 = smul.addr %s732, 2
        %s734 = scalar_lea.vmem %s11, %s733
        %p735 = pneg %p355
        %p736 = pneg %p352
        %s737 = sand.u32 %s36, 1
        %s738 = scalar_lea.sflag [#allocation7], %s737
        %s739 = sand.u32 %s368, 1
        %s740 = smul.addr %s739, 128
        %s741 = scalar_lea.vmem [#allocation8], %s740
        %p742 = pneg %p381
        %p743 = pneg %p378
        %p744 = scmp.lt.s32.totalorder %s41, 1
        %s745 = scalar_select %p744, %s41, 1
        %s746 = scalar_lea.vmem %s13, %s745
        %p747 = pneg %p407
        %p748 = pneg %p404
        %p749 = pneg %p428
        %p750 = pneg %p425
        %p751 = pneg %p449
        %p752 = pneg %p446
        %p753 = pneg %p475
        %p754 = pneg %p472
        %s755 = sand.u32 %s462, 1
        %s756 = scalar_lea.sflag [#allocation5], %s755
        %s757 = sand.u32 %s462, 1
        %s758 = smul.addr %s757, 8
        %s759 = scalar_lea.vmem [#allocation9], %s758
        %p760 = scmp.lt.s32.totalorder %s40, 1
        %s761 = scalar_select %p760, %s40, 1
        %s762 = smul.addr %s761, 8
        %s763 = scalar_lea.vmem %s0, %s762
        %p764 = scmp.lt.s32.totalorder %s40, 1
        %s765 = scalar_select %p764, %s40, 1
        %s766 = scalar_lea.vmem %s1, %s765
        %p767 = scmp.lt.s32.totalorder %s41, 1
        %s768 = scalar_select %p767, %s41, 1
        %s769 = scalar_lea.vmem %s2, %s768
        %p770 = scmp.lt.s32.totalorder %s41, 1
        %s771 = scalar_select %p770, %s41, 1
        %s772 = scalar_lea.vmem %s3, %s771
        %p773 = scmp.lt.s32.totalorder %s41, 1
        %s774 = scalar_select %p773, %s41, 1
        %s775 = smul.addr %s774, 3
        %s776 = scalar_lea.vmem %s5, %s775
        %p777 = scmp.lt.s32.totalorder %s41, 1
        %s778 = scalar_select %p777, %s41, 1
        %s779 = smul.addr %s778, 16
        %s780 = smul.addr %s779, 4
        %s781 = scalar_lea.vmem %s6, %s780
        %p782 = scmp.lt.s32.totalorder %s41, 1
        %s783 = scalar_select %p782, %s41, 1
        %s784 = scalar_lea.vmem %s7, %s783
        %p785 = scmp.lt.s32.totalorder %s41, 1
        %s786 = scalar_select %p785, %s41, 1
        %s787 = scalar_lea.vmem %s8, %s786
        %p788 = scmp.lt.s32.totalorder %s41, 1
        %s789 = scalar_select %p788, %s41, 1
        %s790 = scalar_lea.vmem %s9, %s789
        %p791 = scmp.lt.s32.totalorder %s41, 1
        %s792 = scalar_select %p791, %s41, 1
        %s793 = smul.addr %s792, 2
        %s794 = scalar_lea.vmem %s11, %s793
        %p795 = scmp.lt.s32.totalorder %s41, 1
        %s796 = scalar_select %p795, %s41, 1
        %s797 = scalar_lea.vmem %s13, %s796
        %p799 = scmp.eq.s32.totalorder %s41, 0
        // Predicated region
        $region97: #{encoder_forward.1} parent=83 // pred_check
          %p800 = pneg %p799
        $region98: #{encoder_forward.1} parent=83 // pred_check_branch
          %802 = sbr.rel (%p800) target = $region100
        $region99: #{encoder_forward.1} parent=83 // pred_region
          %v803 = vld [vmem:[%s763] sm:$0xff]
          %804 = vst [vmem:[#allocation2] sm:$0xff] %v803
        $region100: #{encoder_forward.1} parent=83 // pred_fallthru
          _
        %v805 = vld [vmem:[#allocation2] sm:$0xff]
        %v806 = vld [vmem:[%s766] sm:$0x1]
        %vm807 = vcmp.ne.s32.totalorder %v806, 0
        %v808 = vld [vmem:[%s769] sm:$0x1]
        %v809 = vld [vmem:[%s772] sm:$0x1]
        %810 = vadd.xlane.f32.xlu0 %v805
        %v811 = vpop.xlane.xlu0 %810
        %v812 = vrcp.pop 128.0
        %v813 = vmul.f32 %v811, %v812
        %v814 = vsub.f32 %v805, %v813
        %v815 = vmul.f32 %v814, %v814
        %816 = vadd.xlane.f32.xlu0 %v815
        %v817 = vpop.xlane.xlu0 %816
        %v818 = vmul.f32 %v817, 0.007874016
        %v819 = vrsqrt.pop %v818
        %v820 = vmul.f32 %v818, %v819
        %vm821 = vcmp.eq.f32.partialorder %v818, inf
        %v822 = vsel %vm821, %v818, %v820
        %vm823 = vcmp.eq.f32.partialorder %v818, 0.0
        %v824 = vand.u32 %v818, 2147483648
        %v825 = vsel %vm823, %v824, %v822
        %v826 = vadd.f32 %v825, 1e-06
        %v827 = vrcp.pop %v826
        %v828 = vmul.f32 1.0, %v827
        %v830 = vlaneseq
        %v831 = vshrl.u32 %v830, 7
        %v832 = vsub.s32 0, %v831
        %v833 = vrot.slane %v808, %v832
        %v835 = vmul.f32 %v833, %v814
        %v836 = vmul.f32 %v835, %v828
        %v838 = vlaneseq
        %v839 = vshrl.u32 %v838, 7
        %v840 = vsub.s32 0, %v839
        %v841 = vrot.slane %v809, %v840
        %v843 = vadd.f32 %v836, %v841
        %v844 = vpack.c.bf16 %v843, %v843
        %v845 = vld [vmem:[%s645] sm:$0xff]
        %v846 = vld [vmem:[%s645 + $0x8] sm:$0xf]
        %v847 = vld [vmem:[%s645 + $0xc] sm:$0xff]
        %v848 = vld [vmem:[%s645 + $0x14] sm:$0xf]
        %v849 = vld [vmem:[%s645 + $0x18] sm:$0xff]
        %v850 = vld [vmem:[%s645 + $0x20] sm:$0xf]
        %v851 = vld [vmem:[%s645 + $0x24] sm:$0xff]
        %v852 = vld [vmem:[%s645 + $0x2c] sm:$0xf]
        %v853 = vld [vmem:[%s645 + $0x30] sm:$0xff]
        %v854 = vld [vmem:[%s645 + $0x38] sm:$0xf]
        %v855 = vld [vmem:[%s645 + $0x3c] sm:$0xff]
        %v856 = vld [vmem:[%s645 + $0x44] sm:$0xf]
        %v857 = vld [vmem:[%s645 + $0x48] sm:$0xff]
        %v858 = vld [vmem:[%s645 + $0x50] sm:$0xf]
        %v859 = vld [vmem:[%s645 + $0x54] sm:$0xff]
        %v860 = vld [vmem:[%s645 + $0x5c] sm:$0xf]
        %v861 = vld [vmem:[%s645 + $0x60] sm:$0xff]
        %v862 = vld [vmem:[%s645 + $0x68] sm:$0xf]
        %v863 = vld [vmem:[%s645 + $0x6c] sm:$0xff]
        %v864 = vld [vmem:[%s645 + $0x74] sm:$0xf]
        %v865 = vld [vmem:[%s645 + $0x78] sm:$0xff]
        %v866 = vld [vmem:[%s645 + $0x80] sm:$0xf]
        %v867 = vld [vmem:[%s645 + $0x84] sm:$0xff]
        %v868 = vld [vmem:[%s645 + $0x8c] sm:$0xf]
        %v869 = vld [vmem:[%s645 + $0x90] sm:$0xff]
        %v870 = vld [vmem:[%s645 + $0x98] sm:$0xf]
        %v871 = vld [vmem:[%s645 + $0x9c] sm:$0xff]
        %v872 = vld [vmem:[%s645 + $0xa4] sm:$0xf]
        %v873 = vld [vmem:[%s645 + $0xa8] sm:$0xff]
        %v874 = vld [vmem:[%s645 + $0xb0] sm:$0xf]
        %v875 = vld [vmem:[%s645 + $0xb4] sm:$0xff]
        %v876 = vld [vmem:[%s645 + $0xbc] sm:$0xf]
        %v877 = vld [vmem:[%s776] sm:$0x7]
        %v879 = vlaneseq
        %v880 = vshrl.u32 %v879, 7
        %v881 = vsub.s32 0, %v880
        %v882 = vrot.slane %v877, %v881
        %v883 = vlaneseq
        %v884 = vshrl.u32 %v883, 7
        %v885 = vsub.s32 1, %v884
        %v886 = vrot.slane %v877, %v885
        %v887 = vlaneseq
        %v888 = vshrl.u32 %v887, 7
        %v889 = vsub.s32 2, %v888
        %v890 = vrot.slane %v877, %v889
        %v926 = vunpack.c.l.b16 %v845
        %v927 = vunpack.c.h.b16 %v845
        %v928 = vunpack.c.l.b16 %v846
        %v929 = vunpack.c.l.b16 %v847
        %v930 = vunpack.c.h.b16 %v847
        %v931 = vunpack.c.l.b16 %v848
        %v932 = vunpack.c.l.b16 %v849
        %v933 = vunpack.c.h.b16 %v849
        %v934 = vunpack.c.l.b16 %v850
        %v935 = vunpack.c.l.b16 %v851
        %v936 = vunpack.c.h.b16 %v851
        %v937 = vunpack.c.l.b16 %v852
        %v938 = vunpack.c.l.b16 %v853
        %v939 = vunpack.c.h.b16 %v853
        %v940 = vunpack.c.l.b16 %v854
        %v941 = vunpack.c.l.b16 %v855
        %v942 = vunpack.c.h.b16 %v855
        %v943 = vunpack.c.l.b16 %v856
        %v944 = vunpack.c.l.b16 %v857
        %v945 = vunpack.c.h.b16 %v857
        %v946 = vunpack.c.l.b16 %v858
        %v947 = vunpack.c.l.b16 %v859
        %v948 = vunpack.c.h.b16 %v859
        %v949 = vunpack.c.l.b16 %v860
        %v950 = vunpack.c.l.b16 %v861
        %v951 = vunpack.c.h.b16 %v861
        %v952 = vunpack.c.l.b16 %v862
        %v953 = vunpack.c.l.b16 %v863
        %v954 = vunpack.c.h.b16 %v863
        %v955 = vunpack.c.l.b16 %v864
        %v956 = vunpack.c.l.b16 %v865
        %v957 = vunpack.c.h.b16 %v865
        %v958 = vunpack.c.l.b16 %v866
        %v959 = vunpack.c.l.b16 %v867
        %v960 = vunpack.c.h.b16 %v867
        %v961 = vunpack.c.l.b16 %v868
        %v962 = vunpack.c.l.b16 %v869
        %v963 = vunpack.c.h.b16 %v869
        %v964 = vunpack.c.l.b16 %v870
        %v965 = vunpack.c.l.b16 %v871
        %v966 = vunpack.c.h.b16 %v871
        %v967 = vunpack.c.l.b16 %v872
        %v968 = vunpack.c.l.b16 %v873
        %v969 = vunpack.c.h.b16 %v873
        %v970 = vunpack.c.l.b16 %v874
        %v971 = vunpack.c.l.b16 %v875
        %v972 = vunpack.c.h.b16 %v875
        %v973 = vunpack.c.l.b16 %v876
        %v974 = vpack.c.b16 %v929, %v926
        %v975 = vpack.c.b16 %v930, %v927
        %v976 = vpack.c.b16 %v931, %v928
        %v977 = vpack.c.b16 %v935, %v932
        %v978 = vpack.c.b16 %v936, %v933
        %v979 = vpack.c.b16 %v937, %v934
        %v980 = vpack.c.b16 %v941, %v938
        %v981 = vpack.c.b16 %v942, %v939
        %v982 = vpack.c.b16 %v943, %v940
        %v983 = vpack.c.b16 %v947, %v944
        %v984 = vpack.c.b16 %v948, %v945
        %v985 = vpack.c.b16 %v949, %v946
        %v986 = vpack.c.b16 %v953, %v950
        %v987 = vpack.c.b16 %v954, %v951
        %v988 = vpack.c.b16 %v955, %v952
        %v989 = vpack.c.b16 %v959, %v956
        %v990 = vpack.c.b16 %v960, %v957
        %v991 = vpack.c.b16 %v961, %v958
        %v992 = vpack.c.b16 %v965, %v962
        %v993 = vpack.c.b16 %v966, %v963
        %v994 = vpack.c.b16 %v967, %v964
        %v995 = vpack.c.b16 %v971, %v968
        %v996 = vpack.c.b16 %v972, %v969
        %v997 = vpack.c.b16 %v973, %v970
        %1022 = vmatprep.subr.bf16.mxu0 %v975
        %1023 = vmatpush1.bf16.msra.mxu0 %v974
        %1024 = vmatprep.subr.bf16.mxu0 %v978
        %1025 = vmatpush1.bf16.msra.mxu0 %v977
        %1026 = vmatprep.subr.bf16.mxu0 %v981
        %1027 = vmatpush1.bf16.msra.mxu0 %v980
        %1028 = vmatprep.subr.bf16.mxu0 %v984
        %1029 = vmatpush1.bf16.msra.mxu0 %v983
        %1030 = vmatprep.subr.bf16.mxu0 %v987
        %1031 = vmatpush1.bf16.msra.mxu0 %v986
        %1032 = vmatprep.subr.bf16.mxu0 %v990
        %1033 = vmatpush1.bf16.msra.mxu0 %v989
        %1034 = vmatprep.subr.bf16.mxu0 %v993
        %1035 = vmatpush1.bf16.msra.mxu0 %v992
        %1036 = vmatprep.subr.bf16.mxu0 %v996
        %1037 = vmatpush1.bf16.msra.mxu0 %v995
        %1038 = vmatprep.subr.bf16.mxu0 0
        %1039 = vmatpush1.bf16.msra.mxu0 0
        %1040 = vmatprep.subr.bf16.mxu0 0
        %1041 = vmatpush1.bf16.msra.mxu0 0
        %1042 = vmatprep.subr.bf16.mxu0 0
        %1043 = vmatpush1.bf16.msra.mxu0 0
        %1044 = vmatprep.subr.bf16.mxu0 0
        %1045 = vmatpush1.bf16.msra.mxu0 0
        %1046 = vmatprep.subr.bf16.mxu0 0
        %1047 = vmatpush1.bf16.msra.mxu0 0
        %1048 = vmatprep.subr.bf16.mxu0 0
        %1049 = vmatpush1.bf16.msra.mxu0 0
        %1050 = vmatprep.subr.bf16.mxu0 0
        %1051 = vmatpush1.bf16.msra.mxu0 0
        %1052 = vmatprep.subr.bf16.mxu0 0
        %1053 = vmatpush1.bf16.msra.mxu0 0
        %1054 = vmatprep.mubr.bf16.mxu0 0
        %1055 = vmatmul.mubr.bf16.gmra.mrb[0].mxu0 %v844
        %v1056 = vpop.f32.mrb[0].mxu0
        %v1057 = vadd.f32 %v882, %v1056
        %v1058 = vpop.f32.mrb[0].mxu0
        %v1059 = vadd.f32 %v886, %v1058
        %v1060 = vpop.f32.mrb[0].mxu0
        %v1061 = vpop.f32.mrb[0].mxu0
        %1062 = vdwg.mxu0
        %1063 = vmatprep.subr.bf16.mxu0 0
        %1064 = vmatpush1.bf16.msra.mxu0 %v976
        %1065 = vmatprep.subr.bf16.mxu0 0
        %1066 = vmatpush1.bf16.msra.mxu0 %v979
        %1067 = vmatprep.subr.bf16.mxu0 0
        %1068 = vmatpush1.bf16.msra.mxu0 %v982
        %1069 = vmatprep.subr.bf16.mxu0 0
        %1070 = vmatpush1.bf16.msra.mxu0 %v985
        %1071 = vmatprep.subr.bf16.mxu0 0
        %1072 = vmatpush1.bf16.msra.mxu0 %v988
        %1073 = vmatprep.subr.bf16.mxu0 0
        %1074 = vmatpush1.bf16.msra.mxu0 %v991
        %1075 = vmatprep.subr.bf16.mxu0 0
        %1076 = vmatpush1.bf16.msra.mxu0 %v994
        %1077 = vmatprep.subr.bf16.mxu0 0
        %1078 = vmatpush1.bf16.msra.mxu0 %v997
        %1079 = vmatprep.subr.bf16.mxu0 0
        %1080 = vmatpush1.bf16.msra.mxu0 0
        %1081 = vmatprep.subr.bf16.mxu0 0
        %1082 = vmatpush1.bf16.msra.mxu0 0
        %1083 = vmatprep.subr.bf16.mxu0 0
        %1084 = vmatpush1.bf16.msra.mxu0 0
        %1085 = vmatprep.subr.bf16.mxu0 0
        %1086 = vmatpush1.bf16.msra.mxu0 0
        %1087 = vmatprep.subr.bf16.mxu0 0
        %1088 = vmatpush1.bf16.msra.mxu0 0
        %1089 = vmatprep.subr.bf16.mxu0 0
        %1090 = vmatpush1.bf16.msra.mxu0 0
        %1091 = vmatprep.subr.bf16.mxu0 0
        %1092 = vmatpush1.bf16.msra.mxu0 0
        %1093 = vmatprep.subr.bf16.mxu0 0
        %1094 = vmatpush1.bf16.msra.mxu0 0
        %1095 = vmatprep.mubr.bf16.mxu0 0
        %1096 = vmatmul.mubr.bf16.gmra.mrb[0].mxu0 %v844
        %v1097 = vpop.f32.mrb[0].mxu0
        %v1098 = vadd.f32 %v890, %v1097
        %v1099 = vpop.f32.mrb[0].mxu0
        %v1100 = vpop.f32.mrb[0].mxu0
        %v1101 = vpop.f32.mrb[0].mxu0
        %1102 = vdwg.mxu0
        %v1103 = vpack.c.bf16 %v1057, %v1057
        %v1104 = vpack.c.bf16 %v1059, %v1059
        %v1105 = vpack.c.bf16 %v1098, %v1098
        %vm1106 = vcmask 261120
        %v1108 = vsel %vm1106, %v1103, 0
        %v1111 = vsel %vm1106, %v1104, 0
        %1113 = vmatprep.subr.bf16.mxu0 0
        %1114 = vmatpush1.bf16.xpose.msra.mxu0 %v1111
        %1115 = vmatprep.subr.bf16.mxu0 0
        %1116 = vmatpush1.bf16.xpose.msra.mxu0 0
        %1117 = vmatprep.subr.bf16.mxu0 0
        %1118 = vmatpush1.bf16.xpose.msra.mxu0 0
        %1119 = vmatprep.subr.bf16.mxu0 0
        %1120 = vmatpush1.bf16.xpose.msra.mxu0 0
        %1121 = vmatprep.subr.bf16.mxu0 0
        %1122 = vmatpush1.bf16.xpose.msra.mxu0 0
        %1123 = vmatprep.subr.bf16.mxu0 0
        %1124 = vmatpush1.bf16.xpose.msra.mxu0 0
        %1125 = vmatprep.subr.bf16.mxu0 0
        %1126 = vmatpush1.bf16.xpose.msra.mxu0 0
        %1127 = vmatprep.subr.bf16.mxu0 0
        %1128 = vmatpush1.bf16.xpose.msra.mxu0 0
        %1129 = vmatprep.subr.bf16.mxu0 0
        %1130 = vmatpush1.bf16.xpose.msra.mxu0 0
        %1131 = vmatprep.subr.bf16.mxu0 0
        %1132 = vmatpush1.bf16.xpose.msra.mxu0 0
        %1133 = vmatprep.subr.bf16.mxu0 0
        %1134 = vmatpush1.bf16.xpose.msra.mxu0 0
        %1135 = vmatprep.subr.bf16.mxu0 0
        %1136 = vmatpush1.bf16.xpose.msra.mxu0 0
        %1137 = vmatprep.subr.bf16.mxu0 0
        %1138 = vmatpush1.bf16.xpose.msra.mxu0 0
        %1139 = vmatprep.subr.bf16.mxu0 0
        %1140 = vmatpush1.bf16.xpose.msra.mxu0 0
        %1141 = vmatprep.subr.bf16.mxu0 0
        %1142 = vmatpush1.bf16.xpose.msra.mxu0 0
        %1143 = vmatprep.subr.bf16.mxu0 0
        %1144 = vmatpush1.bf16.xpose.msra.mxu0 0
        %1145 = vmatprep.mubr.bf16.mxu0 0
        %1146 = vmatmul.mubr.bf16.gmra.mrb[0].mxu0 %v1108
        %v1147 = vpop.f32.mrb[0].mxu0
        %v1148 = vadd.f32 0.0, %v1147
        %v1149 = vpop.f32.mrb[0].mxu0
        %v1150 = vpop.f32.mrb[0].mxu0
        %v1151 = vpop.f32.mrb[0].mxu0
        %1152 = vdwg.mxu0
        %v1153 = vsel %vm807, 1, 0
        %v1154 = vlaneseq
        %v1155 = vshrl.u32 %v1154, 7
        %v1156 = vsub.s32 0, %v1155
        %v1157 = vrot.slane %v1153, %v1156
        %vm1158 = vcmp.eq.s32.totalorder %v1157, 1
        %v1159 = vsel %vm1158, %v1148, -1e+09
        %vm1160 = vcmask 64512
        %v1161 = vsel %vm1160, %v1159, -inf
        %1162 = vmax.xlane.f32.xlu0 %v1161
        %v1163 = vpop.xlane.xlu0 %1162
        %v1164 = vsub.f32 %v1159, %v1163
        %v1165 = vmul.f32 %v1164, 1.442695
        %v1166 = vpow.pop %v1165
        %v1167 = vsel %vm1160, %v1166, 0.0
        %1168 = vadd.xlane.f32.xlu0 %v1167
        %v1169 = vpop.xlane.xlu0 %1168
        %v1170 = vrcp.pop %v1169
        %v1171 = vmul.f32 %v1166, %v1170
        %v1172 = vpack.c.bf16 %v1171, %v1171
        %v1174 = vsel %vm1160, %v1172, 0
        %vm1176 = vcmask 1043456
        %v1178 = vsel %vm1176, %v1105, 0
        %1180 = vmatprep.subr.bf16.mxu0 0
        %1181 = vmatpush1.bf16.msra.mxu0 %v1178
        %1182 = vmatprep.subr.bf16.mxu0 0
        %1183 = vmatpush1.bf16.msra.mxu0 0
        %1184 = vmatprep.subr.bf16.mxu0 0
        %1185 = vmatpush1.bf16.msra.mxu0 0
        %1186 = vmatprep.subr.bf16.mxu0 0
        %1187 = vmatpush1.bf16.msra.mxu0 0
        %1188 = vmatprep.subr.bf16.mxu0 0
        %1189 = vmatpush1.bf16.msra.mxu0 0
        %1190 = vmatprep.subr.bf16.mxu0 0
        %1191 = vmatpush1.bf16.msra.mxu0 0
        %1192 = vmatprep.subr.bf16.mxu0 0
        %1193 = vmatpush1.bf16.msra.mxu0 0
        %1194 = vmatprep.subr.bf16.mxu0 0
        %1195 = vmatpush1.bf16.msra.mxu0 0
        %1196 = vmatprep.subr.bf16.mxu0 0
        %1197 = vmatpush1.bf16.msra.mxu0 0
        %1198 = vmatprep.subr.bf16.mxu0 0
        %1199 = vmatpush1.bf16.msra.mxu0 0
        %1200 = vmatprep.subr.bf16.mxu0 0
        %1201 = vmatpush1.bf16.msra.mxu0 0
        %1202 = vmatprep.subr.bf16.mxu0 0
        %1203 = vmatpush1.bf16.msra.mxu0 0
        %1204 = vmatprep.subr.bf16.mxu0 0
        %1205 = vmatpush1.bf16.msra.mxu0 0
        %1206 = vmatprep.subr.bf16.mxu0 0
        %1207 = vmatpush1.bf16.msra.mxu0 0
        %1208 = vmatprep.subr.bf16.mxu0 0
        %1209 = vmatpush1.bf16.msra.mxu0 0
        %1210 = vmatprep.subr.bf16.mxu0 0
        %1211 = vmatpush1.bf16.msra.mxu0 0
        %1212 = vmatprep.mubr.bf16.mxu0 0
        %1213 = vmatmul.mubr.bf16.gmra.mrb[0].mxu0 %v1174
        %v1214 = vpop.f32.mrb[0].mxu0
        %v1215 = vadd.f32 0.0, %v1214
        %v1216 = vpop.f32.mrb[0].mxu0
        %v1217 = vpop.f32.mrb[0].mxu0
        %v1218 = vpop.f32.mrb[0].mxu0
        %1219 = vdwg.mxu0
        %1221 = vrot.lane.b32.xlu0 %v1103, 96
        %v1222 = vpop.permute.xlu0 %1221
        %1224 = vrot.lane.b32.xlu0 %v1104, 96
        %v1225 = vpop.permute.xlu0 %1224
        %v1227 = vsel %vm1106, %v1222, 0
        %v1230 = vsel %vm1106, %v1225, 0
        %1232 = vmatprep.subr.bf16.mxu0 0
        %1233 = vmatpush1.bf16.xpose.msra.mxu0 %v1230
        %1234 = vmatprep.subr.bf16.mxu0 0
        %1235 = vmatpush1.bf16.xpose.msra.mxu0 0
        %1236 = vmatprep.subr.bf16.mxu0 0
        %1237 = vmatpush1.bf16.xpose.msra.mxu0 0
        %1238 = vmatprep.subr.bf16.mxu0 0
        %1239 = vmatpush1.bf16.xpose.msra.mxu0 0
        %1240 = vmatprep.subr.bf16.mxu0 0
        %1241 = vmatpush1.bf16.xpose.msra.mxu0 0
        %1242 = vmatprep.subr.bf16.mxu0 0
        %1243 = vmatpush1.bf16.xpose.msra.mxu0 0
        %1244 = vmatprep.subr.bf16.mxu0 0
        %1245 = vmatpush1.bf16.xpose.msra.mxu0 0
        %1246 = vmatprep.subr.bf16.mxu0 0
        %1247 = vmatpush1.bf16.xpose.msra.mxu0 0
        %1248 = vmatprep.subr.bf16.mxu0 0
        %1249 = vmatpush1.bf16.xpose.msra.mxu0 0
        %1250 = vmatprep.subr.bf16.mxu0 0
        %1251 = vmatpush1.bf16.xpose.msra.mxu0 0
        %1252 = vmatprep.subr.bf16.mxu0 0
        %1253 = vmatpush1.bf16.xpose.msra.mxu0 0
        %1254 = vmatprep.subr.bf16.mxu0 0
        %1255 = vmatpush1.bf16.xpose.msra.mxu0 0
        %1256 = vmatprep.subr.bf16.mxu0 0
        %1257 = vmatpush1.bf16.xpose.msra.mxu0 0
        %1258 = vmatprep.subr.bf16.mxu0 0
        %1259 = vmatpush1.bf16.xpose.msra.mxu0 0
        %1260 = vmatprep.subr.bf16.mxu0 0
        %1261 = vmatpush1.bf16.xpose.msra.mxu0 0
        %1262 = vmatprep.subr.bf16.mxu0 0
        %1263 = vmatpush1.bf16.xpose.msra.mxu0 0
        %1264 = vmatprep.mubr.bf16.mxu0 0
        %1265 = vmatmul.mubr.bf16.gmra.mrb[0].mxu0 %v1227
        %v1266 = vpop.f32.mrb[0].mxu0
        %v1267 = vadd.f32 0.0, %v1266
        %v1268 = vpop.f32.mrb[0].mxu0
        %v1269 = vpop.f32.mrb[0].mxu0
        %v1270 = vpop.f32.mrb[0].mxu0
        %1271 = vdwg.mxu0
        %v1272 = vsel %vm1158, %v1267, -1e+09
        %v1273 = vsel %vm1160, %v1272, -inf
        %1274 = vmax.xlane.f32.xlu0 %v1273
        %v1275 = vpop.xlane.xlu0 %1274
        %v1276 = vsub.f32 %v1272, %v1275
        %v1277 = vmul.f32 %v1276, 1.442695
        %v1278 = vpow.pop %v1277
        %v1279 = vsel %vm1160, %v1278, 0.0
        %1280 = vadd.xlane.f32.xlu0 %v1279
        %v1281 = vpop.xlane.xlu0 %1280
        %v1282 = vrcp.pop %v1281
        %v1283 = vmul.f32 %v1278, %v1282
        %v1284 = vpack.c.bf16 %v1283, %v1283
        %1286 = vrot.lane.b32.xlu0 %v1105, 96
        %v1287 = vpop.permute.xlu0 %1286
        %v1289 = vsel %vm1160, %v1284, 0
        %v1292 = vsel %vm1176, %v1287, 0
        %1294 = vmatprep.subr.bf16.mxu0 0
        %1295 = vmatpush1.bf16.msra.mxu0 %v1292
        %1296 = vmatprep.subr.bf16.mxu0 0
        %1297 = vmatpush1.bf16.msra.mxu0 0
        %1298 = vmatprep.subr.bf16.mxu0 0
        %1299 = vmatpush1.bf16.msra.mxu0 0
        %1300 = vmatprep.subr.bf16.mxu0 0
        %1301 = vmatpush1.bf16.msra.mxu0 0
        %1302 = vmatprep.subr.bf16.mxu0 0
        %1303 = vmatpush1.bf16.msra.mxu0 0
        %1304 = vmatprep.subr.bf16.mxu0 0
        %1305 = vmatpush1.bf16.msra.mxu0 0
        %1306 = vmatprep.subr.bf16.mxu0 0
        %1307 = vmatpush1.bf16.msra.mxu0 0
        %1308 = vmatprep.subr.bf16.mxu0 0
        %1309 = vmatpush1.bf16.msra.mxu0 0
        %1310 = vmatprep.subr.bf16.mxu0 0
        %1311 = vmatpush1.bf16.msra.mxu0 0
        %1312 = vmatprep.subr.bf16.mxu0 0
        %1313 = vmatpush1.bf16.msra.mxu0 0
        %1314 = vmatprep.subr.bf16.mxu0 0
        %1315 = vmatpush1.bf16.msra.mxu0 0
        %1316 = vmatprep.subr.bf16.mxu0 0
        %1317 = vmatpush1.bf16.msra.mxu0 0
        %1318 = vmatprep.subr.bf16.mxu0 0
        %1319 = vmatpush1.bf16.msra.mxu0 0
        %1320 = vmatprep.subr.bf16.mxu0 0
        %1321 = vmatpush1.bf16.msra.mxu0 0
        %1322 = vmatprep.subr.bf16.mxu0 0
        %1323 = vmatpush1.bf16.msra.mxu0 0
        %1324 = vmatprep.subr.bf16.mxu0 0
        %1325 = vmatpush1.bf16.msra.mxu0 0
        %1326 = vmatprep.mubr.bf16.mxu0 0
        %1327 = vmatmul.mubr.bf16.gmra.mrb[0].mxu0 %v1289
        %v1328 = vpop.f32.mrb[0].mxu0
        %v1329 = vadd.f32 0.0, %v1328
        %v1330 = vpop.f32.mrb[0].mxu0
        %v1331 = vpop.f32.mrb[0].mxu0
        %v1332 = vpop.f32.mrb[0].mxu0
        %1333 = vdwg.mxu0
        %1334 = vrot.lane.b32.xlu0 %v1103, 64
        %v1335 = vpop.permute.xlu0 %1334
        %1336 = vrot.lane.b32.xlu0 %v1104, 64
        %v1337 = vpop.permute.xlu0 %1336
        %v1339 = vsel %vm1106, %v1335, 0
        %v1342 = vsel %vm1106, %v1337, 0
        %1344 = vmatprep.subr.bf16.mxu0 0
        %1345 = vmatpush1.bf16.xpose.msra.mxu0 %v1342
        %1346 = vmatprep.subr.bf16.mxu0 0
        %1347 = vmatpush1.bf16.xpose.msra.mxu0 0
        %1348 = vmatprep.subr.bf16.mxu0 0
        %1349 = vmatpush1.bf16.xpose.msra.mxu0 0
        %1350 = vmatprep.subr.bf16.mxu0 0
        %1351 = vmatpush1.bf16.xpose.msra.mxu0 0
        %1352 = vmatprep.subr.bf16.mxu0 0
        %1353 = vmatpush1.bf16.xpose.msra.mxu0 0
        %1354 = vmatprep.subr.bf16.mxu0 0
        %1355 = vmatpush1.bf16.xpose.msra.mxu0 0
        %1356 = vmatprep.subr.bf16.mxu0 0
        %1357 = vmatpush1.bf16.xpose.msra.mxu0 0
        %1358 = vmatprep.subr.bf16.mxu0 0
        %1359 = vmatpush1.bf16.xpose.msra.mxu0 0
        %1360 = vmatprep.subr.bf16.mxu0 0
        %1361 = vmatpush1.bf16.xpose.msra.mxu0 0
        %1362 = vmatprep.subr.bf16.mxu0 0
        %1363 = vmatpush1.bf16.xpose.msra.mxu0 0
        %1364 = vmatprep.subr.bf16.mxu0 0
        %1365 = vmatpush1.bf16.xpose.msra.mxu0 0
        %1366 = vmatprep.subr.bf16.mxu0 0
        %1367 = vmatpush1.bf16.xpose.msra.mxu0 0
        %1368 = vmatprep.subr.bf16.mxu0 0
        %1369 = vmatpush1.bf16.xpose.msra.mxu0 0
        %1370 = vmatprep.subr.bf16.mxu0 0
        %1371 = vmatpush1.bf16.xpose.msra.mxu0 0
        %1372 = vmatprep.subr.bf16.mxu0 0
        %1373 = vmatpush1.bf16.xpose.msra.mxu0 0
        %1374 = vmatprep.subr.bf16.mxu0 0
        %1375 = vmatpush1.bf16.xpose.msra.mxu0 0
        %1376 = vmatprep.mubr.bf16.mxu0 0
        %1377 = vmatmul.mubr.bf16.gmra.mrb[0].mxu0 %v1339
        %v1378 = vpop.f32.mrb[0].mxu0
        %v1379 = vadd.f32 0.0, %v1378
        %v1380 = vpop.f32.mrb[0].mxu0
        %v1381 = vpop.f32.mrb[0].mxu0
        %v1382 = vpop.f32.mrb[0].mxu0
        %1383 = vdwg.mxu0
        %v1384 = vsel %vm1158, %v1379, -1e+09
        %v1385 = vsel %vm1160, %v1384, -inf
        %1386 = vmax.xlane.f32.xlu0 %v1385
        %v1387 = vpop.xlane.xlu0 %1386
        %v1388 = vsub.f32 %v1384, %v1387
        %v1389 = vmul.f32 %v1388, 1.442695
        %v1390 = vpow.pop %v1389
        %v1391 = vsel %vm1160, %v1390, 0.0
        %1392 = vadd.xlane.f32.xlu0 %v1391
        %v1393 = vpop.xlane.xlu0 %1392
        %v1394 = vrcp.pop %v1393
        %v1395 = vmul.f32 %v1390, %v1394
        %v1396 = vpack.c.bf16 %v1395, %v1395
        %1397 = vrot.lane.b32.xlu0 %v1105, 64
        %v1398 = vpop.permute.xlu0 %1397
        %v1400 = vsel %vm1160, %v1396, 0
        %v1403 = vsel %vm1176, %v1398, 0
        %1405 = vmatprep.subr.bf16.mxu0 0
        %1406 = vmatpush1.bf16.msra.mxu0 %v1403
        %1407 = vmatprep.subr.bf16.mxu0 0
        %1408 = vmatpush1.bf16.msra.mxu0 0
        %1409 = vmatprep.subr.bf16.mxu0 0
        %1410 = vmatpush1.bf16.msra.mxu0 0
        %1411 = vmatprep.subr.bf16.mxu0 0
        %1412 = vmatpush1.bf16.msra.mxu0 0
        %1413 = vmatprep.subr.bf16.mxu0 0
        %1414 = vmatpush1.bf16.msra.mxu0 0
        %1415 = vmatprep.subr.bf16.mxu0 0
        %1416 = vmatpush1.bf16.msra.mxu0 0
        %1417 = vmatprep.subr.bf16.mxu0 0
        %1418 = vmatpush1.bf16.msra.mxu0 0
        %1419 = vmatprep.subr.bf16.mxu0 0
        %1420 = vmatpush1.bf16.msra.mxu0 0
        %1421 = vmatprep.subr.bf16.mxu0 0
        %1422 = vmatpush1.bf16.msra.mxu0 0
        %1423 = vmatprep.subr.bf16.mxu0 0
        %1424 = vmatpush1.bf16.msra.mxu0 0
        %1425 = vmatprep.subr.bf16.mxu0 0
        %1426 = vmatpush1.bf16.msra.mxu0 0
        %1427 = vmatprep.subr.bf16.mxu0 0
        %1428 = vmatpush1.bf16.msra.mxu0 0
        %1429 = vmatprep.subr.bf16.mxu0 0
        %1430 = vmatpush1.bf16.msra.mxu0 0
        %1431 = vmatprep.subr.bf16.mxu0 0
        %1432 = vmatpush1.bf16.msra.mxu0 0
        %1433 = vmatprep.subr.bf16.mxu0 0
        %1434 = vmatpush1.bf16.msra.mxu0 0
        %1435 = vmatprep.subr.bf16.mxu0 0
        %1436 = vmatpush1.bf16.msra.mxu0 0
        %1437 = vmatprep.mubr.bf16.mxu0 0
        %1438 = vmatmul.mubr.bf16.gmra.mrb[0].mxu0 %v1400
        %v1439 = vpop.f32.mrb[0].mxu0
        %v1440 = vadd.f32 0.0, %v1439
        %v1441 = vpop.f32.mrb[0].mxu0
        %v1442 = vpop.f32.mrb[0].mxu0
        %v1443 = vpop.f32.mrb[0].mxu0
        %1444 = vdwg.mxu0
        %1445 = vrot.lane.b32.xlu0 %v1103, 32
        %v1446 = vpop.permute.xlu0 %1445
        %1447 = vrot.lane.b32.xlu0 %v1104, 32
        %v1448 = vpop.permute.xlu0 %1447
        %v1450 = vsel %vm1106, %v1446, 0
        %v1453 = vsel %vm1106, %v1448, 0
        %1455 = vmatprep.subr.bf16.mxu0 0
        %1456 = vmatpush1.bf16.xpose.msra.mxu0 %v1453
        %1457 = vmatprep.subr.bf16.mxu0 0
        %1458 = vmatpush1.bf16.xpose.msra.mxu0 0
        %1459 = vmatprep.subr.bf16.mxu0 0
        %1460 = vmatpush1.bf16.xpose.msra.mxu0 0
        %1461 = vmatprep.subr.bf16.mxu0 0
        %1462 = vmatpush1.bf16.xpose.msra.mxu0 0
        %1463 = vmatprep.subr.bf16.mxu0 0
        %1464 = vmatpush1.bf16.xpose.msra.mxu0 0
        %1465 = vmatprep.subr.bf16.mxu0 0
        %1466 = vmatpush1.bf16.xpose.msra.mxu0 0
        %1467 = vmatprep.subr.bf16.mxu0 0
        %1468 = vmatpush1.bf16.xpose.msra.mxu0 0
        %1469 = vmatprep.subr.bf16.mxu0 0
        %1470 = vmatpush1.bf16.xpose.msra.mxu0 0
        %1471 = vmatprep.subr.bf16.mxu0 0
        %1472 = vmatpush1.bf16.xpose.msra.mxu0 0
        %1473 = vmatprep.subr.bf16.mxu0 0
        %1474 = vmatpush1.bf16.xpose.msra.mxu0 0
        %1475 = vmatprep.subr.bf16.mxu0 0
        %1476 = vmatpush1.bf16.xpose.msra.mxu0 0
        %1477 = vmatprep.subr.bf16.mxu0 0
        %1478 = vmatpush1.bf16.xpose.msra.mxu0 0
        %1479 = vmatprep.subr.bf16.mxu0 0
        %1480 = vmatpush1.bf16.xpose.msra.mxu0 0
        %1481 = vmatprep.subr.bf16.mxu0 0
        %1482 = vmatpush1.bf16.xpose.msra.mxu0 0
        %1483 = vmatprep.subr.bf16.mxu0 0
        %1484 = vmatpush1.bf16.xpose.msra.mxu0 0
        %1485 = vmatprep.subr.bf16.mxu0 0
        %1486 = vmatpush1.bf16.xpose.msra.mxu0 0
        %1487 = vmatprep.mubr.bf16.mxu0 0
        %1488 = vmatmul.mubr.bf16.gmra.mrb[0].mxu0 %v1450
        %v1489 = vpop.f32.mrb[0].mxu0
        %v1490 = vadd.f32 0.0, %v1489
        %v1491 = vpop.f32.mrb[0].mxu0
        %v1492 = vpop.f32.mrb[0].mxu0
        %v1493 = vpop.f32.mrb[0].mxu0
        %1494 = vdwg.mxu0
        %v1495 = vsel %vm1158, %v1490, -1e+09
        %v1496 = vsel %vm1160, %v1495, -inf
        %1497 = vmax.xlane.f32.xlu0 %v1496
        %v1498 = vpop.xlane.xlu0 %1497
        %v1499 = vsub.f32 %v1495, %v1498
        %v1500 = vmul.f32 %v1499, 1.442695
        %v1501 = vpow.pop %v1500
        %v1502 = vsel %vm1160, %v1501, 0.0
        %1503 = vadd.xlane.f32.xlu0 %v1502
        %v1504 = vpop.xlane.xlu0 %1503
        %v1505 = vrcp.pop %v1504
        %v1506 = vmul.f32 %v1501, %v1505
        %v1507 = vpack.c.bf16 %v1506, %v1506
        %1508 = vrot.lane.b32.xlu0 %v1105, 32
        %v1509 = vpop.permute.xlu0 %1508
        %v1511 = vsel %vm1160, %v1507, 0
        %v1514 = vsel %vm1176, %v1509, 0
        %1516 = vmatprep.subr.bf16.mxu0 0
        %1517 = vmatpush1.bf16.msra.mxu0 %v1514
        %1518 = vmatprep.subr.bf16.mxu0 0
        %1519 = vmatpush1.bf16.msra.mxu0 0
        %1520 = vmatprep.subr.bf16.mxu0 0
        %1521 = vmatpush1.bf16.msra.mxu0 0
        %1522 = vmatprep.subr.bf16.mxu0 0
        %1523 = vmatpush1.bf16.msra.mxu0 0
        %1524 = vmatprep.subr.bf16.mxu0 0
        %1525 = vmatpush1.bf16.msra.mxu0 0
        %1526 = vmatprep.subr.bf16.mxu0 0
        %1527 = vmatpush1.bf16.msra.mxu0 0
        %1528 = vmatprep.subr.bf16.mxu0 0
        %1529 = vmatpush1.bf16.msra.mxu0 0
        %1530 = vmatprep.subr.bf16.mxu0 0
        %1531 = vmatpush1.bf16.msra.mxu0 0
        %1532 = vmatprep.subr.bf16.mxu0 0
        %1533 = vmatpush1.bf16.msra.mxu0 0
        %1534 = vmatprep.subr.bf16.mxu0 0
        %1535 = vmatpush1.bf16.msra.mxu0 0
        %1536 = vmatprep.subr.bf16.mxu0 0
        %1537 = vmatpush1.bf16.msra.mxu0 0
        %1538 = vmatprep.subr.bf16.mxu0 0
        %1539 = vmatpush1.bf16.msra.mxu0 0
        %1540 = vmatprep.subr.bf16.mxu0 0
        %1541 = vmatpush1.bf16.msra.mxu0 0
        %1542 = vmatprep.subr.bf16.mxu0 0
        %1543 = vmatpush1.bf16.msra.mxu0 0
        %1544 = vmatprep.subr.bf16.mxu0 0
        %1545 = vmatpush1.bf16.msra.mxu0 0
        %1546 = vmatprep.subr.bf16.mxu0 0
        %1547 = vmatpush1.bf16.msra.mxu0 0
        %1548 = vmatprep.mubr.bf16.mxu0 0
        %1549 = vmatmul.mubr.bf16.gmra.mrb[0].mxu0 %v1511
        %v1550 = vpop.f32.mrb[0].mxu0
        %v1551 = vadd.f32 0.0, %v1550
        %v1552 = vpop.f32.mrb[0].mxu0
        %v1553 = vpop.f32.mrb[0].mxu0
        %v1554 = vpop.f32.mrb[0].mxu0
        %1555 = vdwg.mxu0
        %1557 = vrot.lane.b32.xlu0 %v1329, 32
        %v1558 = vpop.permute.xlu0 %1557
        %1561 = vrot.lane.b32.xlu0 %v1440, 64
        %v1562 = vpop.permute.xlu0 %1561
        %1565 = vrot.lane.b32.xlu0 %v1551, 96
        %v1566 = vpop.permute.xlu0 %1565
        %v1568 = vsel %vm1106, %v1215, %v1558
        %vm1569 = vcmask 523264
        %v1570 = vsel %vm1569, %v1568, %v1562
        %vm1571 = vcmask 785408
        %v1572 = vsel %vm1571, %v1570, %v1566
        %v1573 = vpack.c.bf16 %v1572, %v1572
        %v1574 = vld [vmem:[%s781] sm:$0xf]
        %v1575 = vld [vmem:[%s781 + $0x4] sm:$0xf]
        %v1576 = vld [vmem:[%s781 + $0x8] sm:$0xf]
        %v1577 = vld [vmem:[%s781 + $0xc] sm:$0xf]
        %v1578 = vld [vmem:[%s781 + $0x10] sm:$0xf]
        %v1579 = vld [vmem:[%s781 + $0x14] sm:$0xf]
        %v1580 = vld [vmem:[%s781 + $0x18] sm:$0xf]
        %v1581 = vld [vmem:[%s781 + $0x1c] sm:$0xf]
        %v1582 = vld [vmem:[%s781 + $0x20] sm:$0xf]
        %v1583 = vld [vmem:[%s781 + $0x24] sm:$0xf]
        %v1584 = vld [vmem:[%s781 + $0x28] sm:$0xf]
        %v1585 = vld [vmem:[%s781 + $0x2c] sm:$0xf]
        %v1586 = vld [vmem:[%s781 + $0x30] sm:$0xf]
        %v1587 = vld [vmem:[%s781 + $0x34] sm:$0xf]
        %v1588 = vld [vmem:[%s781 + $0x38] sm:$0xf]
        %v1589 = vld [vmem:[%s781 + $0x3c] sm:$0xf]
        %v1590 = vld [vmem:[%s784] sm:$0x1]
        %v1592 = vlaneseq
        %v1593 = vshrl.u32 %v1592, 7
        %v1594 = vsub.s32 0, %v1593
        %v1595 = vrot.slane %v1590, %v1594
        %v1613 = vunpack.c.l.b16 %v1574
        %v1614 = vunpack.c.l.b16 %v1575
        %v1615 = vunpack.c.l.b16 %v1576
        %v1616 = vunpack.c.l.b16 %v1577
        %v1617 = vunpack.c.l.b16 %v1578
        %v1618 = vunpack.c.l.b16 %v1579
        %v1619 = vunpack.c.l.b16 %v1580
        %v1620 = vunpack.c.l.b16 %v1581
        %v1621 = vunpack.c.l.b16 %v1582
        %v1622 = vunpack.c.l.b16 %v1583
        %v1623 = vunpack.c.l.b16 %v1584
        %v1624 = vunpack.c.l.b16 %v1585
        %v1625 = vunpack.c.l.b16 %v1586
        %v1626 = vunpack.c.l.b16 %v1587
        %v1627 = vunpack.c.l.b16 %v1588
        %v1628 = vunpack.c.l.b16 %v1589
        %v1629 = vpack.c.b16 %v1614, %v1613
        %v1630 = vpack.c.b16 %v1616, %v1615
        %v1631 = vpack.c.b16 %v1618, %v1617
        %v1632 = vpack.c.b16 %v1620, %v1619
        %v1633 = vpack.c.b16 %v1622, %v1621
        %v1634 = vpack.c.b16 %v1624, %v1623
        %v1635 = vpack.c.b16 %v1626, %v1625
        %v1636 = vpack.c.b16 %v1628, %v1627
        %1645 = vmatprep.subr.bf16.mxu0 0
        %1646 = vmatpush1.bf16.msra.mxu0 %v1629
        %1647 = vmatprep.subr.bf16.mxu0 0
        %1648 = vmatpush1.bf16.msra.mxu0 %v1630
        %1649 = vmatprep.subr.bf16.mxu0 0
        %1650 = vmatpush1.bf16.msra.mxu0 %v1631
        %1651 = vmatprep.subr.bf16.mxu0 0
        %1652 = vmatpush1.bf16.msra.mxu0 %v1632
        %1653 = vmatprep.subr.bf16.mxu0 0
        %1654 = vmatpush1.bf16.msra.mxu0 %v1633
        %1655 = vmatprep.subr.bf16.mxu0 0
        %1656 = vmatpush1.bf16.msra.mxu0 %v1634
        %1657 = vmatprep.subr.bf16.mxu0 0
        %1658 = vmatpush1.bf16.msra.mxu0 %v1635
        %1659 = vmatprep.subr.bf16.mxu0 0
        %1660 = vmatpush1.bf16.msra.mxu0 %v1636
        %1661 = vmatprep.subr.bf16.mxu0 0
        %1662 = vmatpush1.bf16.msra.mxu0 0
        %1663 = vmatprep.subr.bf16.mxu0 0
        %1664 = vmatpush1.bf16.msra.mxu0 0
        %1665 = vmatprep.subr.bf16.mxu0 0
        %1666 = vmatpush1.bf16.msra.mxu0 0
        %1667 = vmatprep.subr.bf16.mxu0 0
        %1668 = vmatpush1.bf16.msra.mxu0 0
        %1669 = vmatprep.subr.bf16.mxu0 0
        %1670 = vmatpush1.bf16.msra.mxu0 0
        %1671 = vmatprep.subr.bf16.mxu0 0
        %1672 = vmatpush1.bf16.msra.mxu0 0
        %1673 = vmatprep.subr.bf16.mxu0 0
        %1674 = vmatpush1.bf16.msra.mxu0 0
        %1675 = vmatprep.subr.bf16.mxu0 0
        %1676 = vmatpush1.bf16.msra.mxu0 0
        %1677 = vmatprep.mubr.bf16.mxu0 0
        %1678 = vmatmul.mubr.bf16.gmra.mrb[0].mxu0 %v1573
        %v1679 = vpop.f32.mrb[0].mxu0
        %v1680 = vadd.f32 %v1595, %v1679
        %v1681 = vpop.f32.mrb[0].mxu0
        %v1682 = vpop.f32.mrb[0].mxu0
        %v1683 = vpop.f32.mrb[0].mxu0
        %1684 = vdwg.mxu0
        %v1685 = vadd.f32 %v805, %v1680
        %v1686 = vld [vmem:[%s787] sm:$0x1]
        %v1687 = vld [vmem:[%s790] sm:$0x1]
        %1688 = vadd.xlane.f32.xlu0 %v1685
        %v1689 = vpop.xlane.xlu0 %1688
        %v1690 = vmul.f32 %v1689, %v812
        %v1691 = vsub.f32 %v1685, %v1690
        %v1692 = vmul.f32 %v1691, %v1691
        %1693 = vadd.xlane.f32.xlu0 %v1692
        %v1694 = vpop.xlane.xlu0 %1693
        %v1695 = vmul.f32 %v1694, 0.007874016
        %v1696 = vrsqrt.pop %v1695
        %v1697 = vmul.f32 %v1695, %v1696
        %vm1698 = vcmp.eq.f32.partialorder %v1695, inf
        %v1699 = vsel %vm1698, %v1695, %v1697
        %vm1700 = vcmp.eq.f32.partialorder %v1695, 0.0
        %v1701 = vand.u32 %v1695, 2147483648
        %v1702 = vsel %vm1700, %v1701, %v1699
        %v1703 = vadd.f32 %v1702, 1e-06
        %v1704 = vrcp.pop %v1703
        %v1705 = vmul.f32 1.0, %v1704
        %v1707 = vlaneseq
        %v1708 = vshrl.u32 %v1707, 7
        %v1709 = vsub.s32 0, %v1708
        %v1710 = vrot.slane %v1686, %v1709
        %v1712 = vmul.f32 %v1710, %v1691
        %v1713 = vmul.f32 %v1712, %v1705
        %v1715 = vlaneseq
        %v1716 = vshrl.u32 %v1715, 7
        %v1717 = vsub.s32 0, %v1716
        %v1718 = vrot.slane %v1687, %v1717
        %v1720 = vadd.f32 %v1713, %v1718
        %v1721 = vpack.c.bf16 %v1720, %v1720
        %v1722 = vld [vmem:[%s654] sm:$0xff]
        %v1723 = vld [vmem:[%s654 + $0x8] sm:$0xff]
        %v1724 = vld [vmem:[%s654 + $0x10] sm:$0xff]
        %v1725 = vld [vmem:[%s654 + $0x18] sm:$0xff]
        %v1726 = vld [vmem:[%s654 + $0x20] sm:$0xff]
        %v1727 = vld [vmem:[%s654 + $0x28] sm:$0xff]
        %v1728 = vld [vmem:[%s654 + $0x30] sm:$0xff]
        %v1729 = vld [vmem:[%s654 + $0x38] sm:$0xff]
        %v1730 = vld [vmem:[%s654 + $0x40] sm:$0xff]
        %v1731 = vld [vmem:[%s654 + $0x48] sm:$0xff]
        %v1732 = vld [vmem:[%s654 + $0x50] sm:$0xff]
        %v1733 = vld [vmem:[%s654 + $0x58] sm:$0xff]
        %v1734 = vld [vmem:[%s654 + $0x60] sm:$0xff]
        %v1735 = vld [vmem:[%s654 + $0x68] sm:$0xff]
        %v1736 = vld [vmem:[%s654 + $0x70] sm:$0xff]
        %v1737 = vld [vmem:[%s654 + $0x78] sm:$0xff]
        %v1738 = vld [vmem:[%s794] sm:$0x3]
        %v1740 = vlaneseq
        %v1741 = vshrl.u32 %v1740, 7
        %v1742 = vsub.s32 0, %v1741
        %v1743 = vrot.slane %v1738, %v1742
        %v1744 = vlaneseq
        %v1745 = vshrl.u32 %v1744, 7
        %v1746 = vsub.s32 1, %v1745
        %v1747 = vrot.slane %v1738, %v1746
        %v1766 = vunpack.c.l.b16 %v1722
        %v1767 = vunpack.c.h.b16 %v1722
        %v1768 = vunpack.c.l.b16 %v1723
        %v1769 = vunpack.c.h.b16 %v1723
        %v1770 = vunpack.c.l.b16 %v1724
        %v1771 = vunpack.c.h.b16 %v1724
        %v1772 = vunpack.c.l.b16 %v1725
        %v1773 = vunpack.c.h.b16 %v1725
        %v1774 = vunpack.c.l.b16 %v1726
        %v1775 = vunpack.c.h.b16 %v1726
        %v1776 = vunpack.c.l.b16 %v1727
        %v1777 = vunpack.c.h.b16 %v1727
        %v1778 = vunpack.c.l.b16 %v1728
        %v1779 = vunpack.c.h.b16 %v1728
        %v1780 = vunpack.c.l.b16 %v1729
        %v1781 = vunpack.c.h.b16 %v1729
        %v1782 = vunpack.c.l.b16 %v1730
        %v1783 = vunpack.c.h.b16 %v1730
        %v1784 = vunpack.c.l.b16 %v1731
        %v1785 = vunpack.c.h.b16 %v1731
        %v1786 = vunpack.c.l.b16 %v1732
        %v1787 = vunpack.c.h.b16 %v1732
        %v1788 = vunpack.c.l.b16 %v1733
        %v1789 = vunpack.c.h.b16 %v1733
        %v1790 = vunpack.c.l.b16 %v1734
        %v1791 = vunpack.c.h.b16 %v1734
        %v1792 = vunpack.c.l.b16 %v1735
        %v1793 = vunpack.c.h.b16 %v1735
        %v1794 = vunpack.c.l.b16 %v1736
        %v1795 = vunpack.c.h.b16 %v1736
        %v1796 = vunpack.c.l.b16 %v1737
        %v1797 = vunpack.c.h.b16 %v1737
        %v1798 = vpack.c.b16 %v1768, %v1766
        %v1799 = vpack.c.b16 %v1769, %v1767
        %v1800 = vpack.c.b16 %v1772, %v1770
        %v1801 = vpack.c.b16 %v1773, %v1771
        %v1802 = vpack.c.b16 %v1776, %v1774
        %v1803 = vpack.c.b16 %v1777, %v1775
        %v1804 = vpack.c.b16 %v1780, %v1778
        %v1805 = vpack.c.b16 %v1781, %v1779
        %v1806 = vpack.c.b16 %v1784, %v1782
        %v1807 = vpack.c.b16 %v1785, %v1783
        %v1808 = vpack.c.b16 %v1788, %v1786
        %v1809 = vpack.c.b16 %v1789, %v1787
        %v1810 = vpack.c.b16 %v1792, %v1790
        %v1811 = vpack.c.b16 %v1793, %v1791
        %v1812 = vpack.c.b16 %v1796, %v1794
        %v1813 = vpack.c.b16 %v1797, %v1795
        %1830 = vmatprep.subr.bf16.mxu0 %v1799
        %1831 = vmatpush1.bf16.msra.mxu0 %v1798
        %1832 = vmatprep.subr.bf16.mxu0 %v1801
        %1833 = vmatpush1.bf16.msra.mxu0 %v1800
        %1834 = vmatprep.subr.bf16.mxu0 %v1803
        %1835 = vmatpush1.bf16.msra.mxu0 %v1802
        %1836 = vmatprep.subr.bf16.mxu0 %v1805
        %1837 = vmatpush1.bf16.msra.mxu0 %v1804
        %1838 = vmatprep.subr.bf16.mxu0 %v1807
        %1839 = vmatpush1.bf16.msra.mxu0 %v1806
        %1840 = vmatprep.subr.bf16.mxu0 %v1809
        %1841 = vmatpush1.bf16.msra.mxu0 %v1808
        %1842 = vmatprep.subr.bf16.mxu0 %v1811
        %1843 = vmatpush1.bf16.msra.mxu0 %v1810
        %1844 = vmatprep.subr.bf16.mxu0 %v1813
        %1845 = vmatpush1.bf16.msra.mxu0 %v1812
        %1846 = vmatprep.subr.bf16.mxu0 0
        %1847 = vmatpush1.bf16.msra.mxu0 0
        %1848 = vmatprep.subr.bf16.mxu0 0
        %1849 = vmatpush1.bf16.msra.mxu0 0
        %1850 = vmatprep.subr.bf16.mxu0 0
        %1851 = vmatpush1.bf16.msra.mxu0 0
        %1852 = vmatprep.subr.bf16.mxu0 0
        %1853 = vmatpush1.bf16.msra.mxu0 0
        %1854 = vmatprep.subr.bf16.mxu0 0
        %1855 = vmatpush1.bf16.msra.mxu0 0
        %1856 = vmatprep.subr.bf16.mxu0 0
        %1857 = vmatpush1.bf16.msra.mxu0 0
        %1858 = vmatprep.subr.bf16.mxu0 0
        %1859 = vmatpush1.bf16.msra.mxu0 0
        %1860 = vmatprep.subr.bf16.mxu0 0
        %1861 = vmatpush1.bf16.msra.mxu0 0
        %1862 = vmatprep.mubr.bf16.mxu0 0
        %1863 = vmatmul.mubr.bf16.gmra.mrb[0].mxu0 %v1721
        %v1864 = vpop.f32.mrb[0].mxu0
        %v1865 = vadd.f32 %v1743, %v1864
        %v1866 = vpop.f32.mrb[0].mxu0
        %v1867 = vadd.f32 %v1747, %v1866
        %v1868 = vpop.f32.mrb[0].mxu0
        %v1869 = vpop.f32.mrb[0].mxu0
        %1870 = vdwg.mxu0
        %v1871 = vmax.f32 %v1865, 0.0
        %v1872 = vmax.f32 %v1867, 0.0
        %v1873 = vpack.c.bf16 %v1871, %v1871
        %v1874 = vpack.c.bf16 %v1872, %v1872
        %v1875 = vld [vmem:[%s663] sm:$0xf]
        %v1876 = vld [vmem:[%s663 + $0x4] sm:$0xf]
        %v1877 = vld [vmem:[%s663 + $0x8] sm:$0xf]
        %v1878 = vld [vmem:[%s663 + $0xc] sm:$0xf]
        %v1879 = vld [vmem:[%s663 + $0x10] sm:$0xf]
        %v1880 = vld [vmem:[%s663 + $0x14] sm:$0xf]
        %v1881 = vld [vmem:[%s663 + $0x18] sm:$0xf]
        %v1882 = vld [vmem:[%s663 + $0x1c] sm:$0xf]
        %v1883 = vld [vmem:[%s663 + $0x20] sm:$0xf]
        %v1884 = vld [vmem:[%s663 + $0x24] sm:$0xf]
        %v1885 = vld [vmem:[%s663 + $0x28] sm:$0xf]
        %v1886 = vld [vmem:[%s663 + $0x2c] sm:$0xf]
        %v1887 = vld [vmem:[%s663 + $0x30] sm:$0xf]
        %v1888 = vld [vmem:[%s663 + $0x34] sm:$0xf]
        %v1889 = vld [vmem:[%s663 + $0x38] sm:$0xf]
        %v1890 = vld [vmem:[%s663 + $0x3c] sm:$0xf]
        %v1891 = vld [vmem:[%s663 + $0x40] sm:$0xf]
        %v1892 = vld [vmem:[%s663 + $0x44] sm:$0xf]
        %v1893 = vld [vmem:[%s663 + $0x48] sm:$0xf]
        %v1894 = vld [vmem:[%s663 + $0x4c] sm:$0xf]
        %v1895 = vld [vmem:[%s663 + $0x50] sm:$0xf]
        %v1896 = vld [vmem:[%s663 + $0x54] sm:$0xf]
        %v1897 = vld [vmem:[%s663 + $0x58] sm:$0xf]
        %v1898 = vld [vmem:[%s663 + $0x5c] sm:$0xf]
        %v1899 = vld [vmem:[%s663 + $0x60] sm:$0xf]
        %v1900 = vld [vmem:[%s663 + $0x64] sm:$0xf]
        %v1901 = vld [vmem:[%s663 + $0x68] sm:$0xf]
        %v1902 = vld [vmem:[%s663 + $0x6c] sm:$0xf]
        %v1903 = vld [vmem:[%s663 + $0x70] sm:$0xf]
        %v1904 = vld [vmem:[%s663 + $0x74] sm:$0xf]
        %v1905 = vld [vmem:[%s663 + $0x78] sm:$0xf]
        %v1906 = vld [vmem:[%s663 + $0x7c] sm:$0xf]
        %v1907 = vld [vmem:[%s797] sm:$0x1]
        %v1909 = vlaneseq
        %v1910 = vshrl.u32 %v1909, 7
        %v1911 = vsub.s32 0, %v1910
        %v1912 = vrot.slane %v1907, %v1911
        %v1946 = vunpack.c.l.b16 %v1875
        %v1947 = vunpack.c.l.b16 %v1876
        %v1948 = vunpack.c.l.b16 %v1877
        %v1949 = vunpack.c.l.b16 %v1878
        %v1950 = vunpack.c.l.b16 %v1879
        %v1951 = vunpack.c.l.b16 %v1880
        %v1952 = vunpack.c.l.b16 %v1881
        %v1953 = vunpack.c.l.b16 %v1882
        %v1954 = vunpack.c.l.b16 %v1883
        %v1955 = vunpack.c.l.b16 %v1884
        %v1956 = vunpack.c.l.b16 %v1885
        %v1957 = vunpack.c.l.b16 %v1886
        %v1958 = vunpack.c.l.b16 %v1887
        %v1959 = vunpack.c.l.b16 %v1888
        %v1960 = vunpack.c.l.b16 %v1889
        %v1961 = vunpack.c.l.b16 %v1890
        %v1962 = vunpack.c.l.b16 %v1891
        %v1963 = vunpack.c.l.b16 %v1892
        %v1964 = vunpack.c.l.b16 %v1893
        %v1965 = vunpack.c.l.b16 %v1894
        %v1966 = vunpack.c.l.b16 %v1895
        %v1967 = vunpack.c.l.b16 %v1896
        %v1968 = vunpack.c.l.b16 %v1897
        %v1969 = vunpack.c.l.b16 %v1898
        %v1970 = vunpack.c.l.b16 %v1899
        %v1971 = vunpack.c.l.b16 %v1900
        %v1972 = vunpack.c.l.b16 %v1901
        %v1973 = vunpack.c.l.b16 %v1902
        %v1974 = vunpack.c.l.b16 %v1903
        %v1975 = vunpack.c.l.b16 %v1904
        %v1976 = vunpack.c.l.b16 %v1905
        %v1977 = vunpack.c.l.b16 %v1906
        %v1978 = vpack.c.b16 %v1947, %v1946
        %v1979 = vpack.c.b16 %v1949, %v1948
        %v1980 = vpack.c.b16 %v1951, %v1950
        %v1981 = vpack.c.b16 %v1953, %v1952
        %v1982 = vpack.c.b16 %v1955, %v1954
        %v1983 = vpack.c.b16 %v1957, %v1956
        %v1984 = vpack.c.b16 %v1959, %v1958
        %v1985 = vpack.c.b16 %v1961, %v1960
        %v1986 = vpack.c.b16 %v1963, %v1962
        %v1987 = vpack.c.b16 %v1965, %v1964
        %v1988 = vpack.c.b16 %v1967, %v1966
        %v1989 = vpack.c.b16 %v1969, %v1968
        %v1990 = vpack.c.b16 %v1971, %v1970
        %v1991 = vpack.c.b16 %v1973, %v1972
        %v1992 = vpack.c.b16 %v1975, %v1974
        %v1993 = vpack.c.b16 %v1977, %v1976
        %2010 = vmatprep.subr.bf16.mxu0 0
        %2011 = vmatpush1.bf16.msra.mxu0 %v1978
        %2012 = vmatprep.subr.bf16.mxu0 0
        %2013 = vmatpush1.bf16.msra.mxu0 %v1979
        %2014 = vmatprep.subr.bf16.mxu0 0
        %2015 = vmatpush1.bf16.msra.mxu0 %v1980
        %2016 = vmatprep.subr.bf16.mxu0 0
        %2017 = vmatpush1.bf16.msra.mxu0 %v1981
        %2018 = vmatprep.subr.bf16.mxu0 0
        %2019 = vmatpush1.bf16.msra.mxu0 %v1982
        %2020 = vmatprep.subr.bf16.mxu0 0
        %2021 = vmatpush1.bf16.msra.mxu0 %v1983
        %2022 = vmatprep.subr.bf16.mxu0 0
        %2023 = vmatpush1.bf16.msra.mxu0 %v1984
        %2024 = vmatprep.subr.bf16.mxu0 0
        %2025 = vmatpush1.bf16.msra.mxu0 %v1985
        %2026 = vmatprep.subr.bf16.mxu0 0
        %2027 = vmatpush1.bf16.msra.mxu0 %v1986
        %2028 = vmatprep.subr.bf16.mxu0 0
        %2029 = vmatpush1.bf16.msra.mxu0 %v1987
        %2030 = vmatprep.subr.bf16.mxu0 0
        %2031 = vmatpush1.bf16.msra.mxu0 %v1988
        %2032 = vmatprep.subr.bf16.mxu0 0
        %2033 = vmatpush1.bf16.msra.mxu0 %v1989
        %2034 = vmatprep.subr.bf16.mxu0 0
        %2035 = vmatpush1.bf16.msra.mxu0 %v1990
        %2036 = vmatprep.subr.bf16.mxu0 0
        %2037 = vmatpush1.bf16.msra.mxu0 %v1991
        %2038 = vmatprep.subr.bf16.mxu0 0
        %2039 = vmatpush1.bf16.msra.mxu0 %v1992
        %2040 = vmatprep.subr.bf16.mxu0 0
        %2041 = vmatpush1.bf16.msra.mxu0 %v1993
        %2042 = vmatprep.mubr.bf16.mxu0 %v1874
        %2043 = vmatmul.mubr.bf16.gmra.mrb[0].mxu0 %v1873
        %v2044 = vpop.f32.mrb[0].mxu0
        %v2045 = vadd.f32 %v1912, %v2044
        %v2046 = vpop.f32.mrb[0].mxu0
        %v2047 = vpop.f32.mrb[0].mxu0
        %v2048 = vpop.f32.mrb[0].mxu0
        %2049 = vdwg.mxu0
        %v2050 = vadd.f32 %v1685, %v2045
        %2051 = vst [vmem:[#allocation2] sm:$0xff] %v2050
        %p2052 = scmp.eq.s32.totalorder %s41, 1
        // Predicated region
        $region101: #{encoder_forward.1} parent=83 // pred_check
          %p2053 = pneg %p2052
        $region102: #{encoder_forward.1} parent=83 // pred_check_branch
          %2055 = sbr.rel (%p2053) target = $region104
        $region103: #{encoder_forward.1} parent=83 // pred_region
          %v2056 = vld [vmem:[%s14] sm:$0x1]
          %v2057 = vld [vmem:[%s15] sm:$0x1]
          %2058 = vadd.xlane.f32.xlu0 %v2050
          %v2059 = vpop.xlane.xlu0 %2058
          %v2060 = vmul.f32 %v2059, %v812
          %v2061 = vsub.f32 %v2050, %v2060
          %v2062 = vmul.f32 %v2061, %v2061
          %2063 = vadd.xlane.f32.xlu0 %v2062
          %v2064 = vpop.xlane.xlu0 %2063
          %v2065 = vmul.f32 %v2064, 0.007874016
          %v2066 = vrsqrt.pop %v2065
          %v2067 = vmul.f32 %v2065, %v2066
          %vm2068 = vcmp.eq.f32.partialorder %v2065, inf
          %v2069 = vsel %vm2068, %v2065, %v2067
          %vm2070 = vcmp.eq.f32.partialorder %v2065, 0.0
          %v2071 = vand.u32 %v2065, 2147483648
          %v2072 = vsel %vm2070, %v2071, %v2069
          %v2073 = vadd.f32 %v2072, 1e-06
          %v2074 = vrcp.pop %v2073
          %v2075 = vmul.f32 1.0, %v2074
          %v2077 = vlaneseq
          %v2078 = vshrl.u32 %v2077, 7
          %v2079 = vsub.s32 0, %v2078
          %v2080 = vrot.slane %v2056, %v2079
          %v2082 = vmul.f32 %v2080, %v2061
          %v2083 = vmul.f32 %v2082, %v2075
          %v2085 = vlaneseq
          %v2086 = vshrl.u32 %v2085, 7
          %v2087 = vsub.s32 0, %v2086
          %v2088 = vrot.slane %v2057, %v2087
          %v2090 = vadd.f32 %v2083, %v2088
          %2091 = vst [vmem:[%s759] sm:$0xff] %v2090
        $region104: #{encoder_forward.1} parent=83 // pred_fallthru
          _
        %s2092 = sand.u32 %s462, 1
        %s2093 = scalar_lea.sflag [#allocation5], %s2092
        %s2094 = sand.u32 %s462, 1
        %s2095 = smul.addr %s2094, 8
        %s2096 = scalar_lea.vmem [#allocation9], %s2095
        // Predicated region
        $region105: #{encoder_forward.1} parent=83 // pred_check
          %p2097 = pneg %p472
        $region106: #{encoder_forward.1} parent=83 // pred_check_branch
          %2099 = sbr.rel (%p2097) target = $region108
        $region107: #{encoder_forward.1} parent=83 // pred_region
          %s2101 = ssub.s32 128, 128
          %2102 = vsyncadd %s2093, %s2101
          %s2103 = smul.addr %s40, 128
          %s2104 = scalar_lea.hbm %s16, %s2103
          %s2106 = sshll.u32 %s2096, 4
          %s2107 = int_to_ptr.vmem [resolvable:$true] %s2106
          %2109 = dma.vmem_to_hbm [thread:$0]  %s2107, 128, %s2104, %s2093
        $region108: #{encoder_forward.1} parent=83 // pred_fallthru
          _
      $region84: #{encoder_forward.1} parent=5 // pred_fallthru
        _
      %p2110 = scmp.le.s32.totalorder 2, %s31
      // Predicated region
      $region109: #{encoder_forward.1} parent=5 // pred_check
        %p2111 = pneg %p2110
      $region110: #{encoder_forward.1} parent=5 // pred_check_branch
        %2113 = sbr.rel (%p2111) target = $region112
      $region111: #{encoder_forward.1} parent=5 // pred_region
        %s2114 = ssub.s32 %s31, 2
        // Predicated region
        $region113: #{encoder_forward.1} parent=111 // pred_check
          %p2115 = pneg %p478
        $region114: #{encoder_forward.1} parent=111 // pred_check_branch
          %2117 = sbr.rel (%p2115) target = $region116
        $region115: #{encoder_forward.1} parent=111 // pred_region
          %s2118 = sand.u32 %s463, 1
          %s2119 = scalar_lea.sflag [#allocation5], %s2118
          %s2120 = sand.u32 %s463, 1
          %s2121 = smul.addr %s2120, 8
          %s2122 = scalar_lea.vmem [#allocation9], %s2121
          %2123 = dma.done %s2119, 128
        $region116: #{encoder_forward.1} parent=111 // pred_fallthru
          _
      $region112: #{encoder_forward.1} parent=5 // pred_fallthru
        _
    $region6: #{encoder_forward.1} parent=1 // loop_footer
      %s35 = sadd.s32 1, %s31
    $region7: #{encoder_forward.1} parent=1 // loop_footer_branch
      %30 = sbr.rel target = $region3
    $region8: #{encoder_forward.1} parent=1 // loop_exit
      _
    %2124 = vsyncpa [#allocation4], 1
    %s2125 = scalar_lea.sflag [#allocation4], 1
    %2126 = vsyncpa %s2125, 1
    %2127 = vsyncpa [#allocation7], 1
    %s2128 = scalar_lea.sflag [#allocation7], 1
    %2129 = vsyncpa %s2128, 1
    %2130 = vsyncpa [#allocation5], 1
    %s2131 = scalar_lea.sflag [#allocation5], 1
    %2132 = vsyncpa %s2131, 1

</llo_original>
